<compile_context>
chip_gen: v7x
topology: tpu7x:2x2x1
jax: 0.10.0
libtpu: 0.0.40
codegen_flags: <defaults>
</compile_context>

<pallas_src>
import functools

import jax
import jax.numpy as jnp
from jax.experimental import pallas as pl
from jax.experimental.pallas import tpu as pltpu


# ------------------------------- fused Pallas kernel --------------------------------

def _decoder_kernel(cx_ref, ct_ref,
                    w1_ref, b1_ref, w2_ref, b2_ref, w3_ref, b3_ref,
                    w4_ref, b4_ref, w5_ref, b5_ref,
                    o_ref, tap_ref, *, ksizes, dim, activation):
    """Fused 5-layer 'same' conv stack for one batch tile.

    cx_ref, ct_ref : (Bt, L, Dim)    encoder codes (channels-last)
    w*_ref         : (K*Cin, Cout)   im2col-flattened effective conv weights
    b*_ref         : (1, Cout)       biases
    o_ref          : (Bt, L, Cout5)  output (channels-last; final NCW permute done in wrapper)
    tap_ref        : (L, maxKCin)    VMEM im2col scratch (zero-memset == "same" padding)
    """
    w_refs = (w1_ref, w2_ref, w3_ref, w4_ref, w5_ref)
    b_refs = (b1_ref, b2_ref, b3_ref, b4_ref, b5_ref)
    Bt, L, _ = cx_ref.shape

    def act(v):
        if activation == 'Relu':
            return jnp.maximum(v, 0.0)
        if activation == 'Tanh':
            return jnp.tanh(v)
        return v  # 'None' -> identity

    for bi in range(Bt):  # static unroll over the batch tile
        # Layer-1 input is concat(code_x, code_t) along channels; keep it as two pieces so the
        # concat happens for free while scattering into the im2col scratch.
        pieces = ((cx_ref[bi].astype(jnp.float32), 0),
                  (ct_ref[bi].astype(jnp.float32), dim))
        cin = 2 * dim
        for li, K in enumerate(ksizes):
            p = (K - 1) // 2
            tap_ref[...] = jnp.zeros_like(tap_ref)          # zero halo == "same" padding
            for k in range(K):                              # static taps: shifted copies
                shift = k - p
                dst_lo = max(0, -shift)
                src_lo = max(0, shift)
                n = L - abs(shift)
                for val, col in pieces:
                    tap_ref[pl.ds(dst_lo, n),
                            pl.ds(k * cin + col, val.shape[1])] = val[src_lo:src_lo + n, :]
            taps = tap_ref[pl.ds(0, L), pl.ds(0, K * cin)]  # (L, K*Cin)
            y = jnp.dot(taps, w_refs[li][...],
                        preferred_element_type=jnp.float32) + b_refs[li][...]
            y = act(y)
            pieces = ((y, 0),)
            cin = y.shape[1]
        o_ref[bi] = pieces[0][0].astype(o_ref.dtype)


def _pick_batch_tile(B):
    """Batch elements per grid step: amortize step overhead but keep >=2 steps for megacore."""
    for bt in (8, 4, 2):
        if B % bt == 0 and B // bt >= 2:
            return bt
    return 1


def my_ts_conv_decoder2(code_x, code_t, params, activation='Relu'):
    """code_x, code_t: (B, L, Dim) -> output (B, nChannels, L), matching PyTorch NCW."""
    if activation not in ('Relu', 'Tanh', 'None'):
        raise ValueError('Check activation')
    B, L, dim = code_x.shape
    ksizes = tuple(int(w.shape[0]) for w, _ in params)                       # (3,13,3,5,3)
    w_flats = [w.reshape(w.shape[0] * w.shape[1], w.shape[2]).astype(jnp.float32)
               for w, _ in params]                                           # (K*Cin, Cout)
    biases = [b.reshape(1, -1).astype(jnp.float32) for _, b in params]       # (1, Cout)
    n_out = w_flats[-1].shape[1]
    kc_max = max(wf.shape[0] for wf in w_flats)

    bt = _pick_batch_tile(B)
    grid = (B // bt,)

    in_specs = [pl.BlockSpec((bt, L, dim), lambda i: (i, 0, 0)),
                pl.BlockSpec((bt, L, dim), lambda i: (i, 0, 0))]
    flat_wb = []
    for wf, bb in zip(w_flats, biases):
        in_specs.append(pl.BlockSpec(wf.shape, lambda i: (0, 0)))  # grid-invariant: loaded once
        in_specs.append(pl.BlockSpec(bb.shape, lambda i: (0, 0)))
        flat_wb += [wf, bb]

    kern = functools.partial(_decoder_kernel, ksizes=ksizes, dim=dim, activation=activation)
    out_blc = pl.pallas_call(
        kern,
        out_shape=jax.ShapeDtypeStruct((B, L, n_out), code_x.dtype),
        grid=grid,
        in_specs=in_specs,
        out_specs=pl.BlockSpec((bt, L, n_out), lambda i: (i, 0, 0)),
        scratch_shapes=[pltpu.VMEM((L, kc_max), jnp.float32)],
        compiler_params=pltpu.CompilerParams(dimension_semantics=("parallel",)),
    )(code_x, code_t, *flat_wb)
    # Final permute back to PyTorch NCW; a single tiny XLA transpose on (B, L, nChannels).
    return jnp.transpose(out_blc, (0, 2, 1))


# ----------------------------- parameter setup (glue) --------------------------------

def _spectral_normalize_convtranspose(w_t):
    """PyTorch spectral_norm on ConvTranspose1d uses dim=1: reshape to (Cout, Cin*K).

    Uses the exact largest singular value (converged limit of the power iteration).
    """
    cin, cout, k = w_t.shape
    mat = jnp.transpose(w_t, (1, 0, 2)).reshape(cout, cin * k)
    sigma = jnp.max(jnp.linalg.svd(mat, compute_uv=False))
    return w_t / sigma


def _effective_conv_weight(w_t):
    """(Cin, Cout, K) ConvTranspose1d weight -> (K, Cin, Cout) standard 'same'-conv weight."""
    return jnp.transpose(jnp.flip(w_t, axis=2), (2, 0, 1))


def init_decoder_params(key, dim, n_channels, use_sn=False):
    """Deterministic synthetic parameters for the 5 transposed-conv layers."""
    layer_defs = [
        (2 * dim, 8, 3),
        (8, 8, 13),
        (8, 8, 3),
        (8, 8, 5),
        (8, n_channels, 3),
    ]
    params = []
    for cin, cout, k in layer_defs:
        key, kw, kb = jax.random.split(key, 3)
        w_t = 0.1 * jax.random.normal(kw, (cin, cout, k), jnp.float32)  # ConvTranspose1d layout
        b = 0.1 * jax.random.normal(kb, (cout,), jnp.float32)
        if not use_sn:  # module's (inverted) logic: UseSN=False -> spectral_norm applied
            w_t = _spectral_normalize_convtranspose(w_t)
        params.append((_effective_conv_weight(w_t), b))
    return params


# --------------------------- pure-JAX reference (check) ------------------------------

def _reference(code_x, code_t, params, activation='Relu'):
    x = jnp.concatenate([code_x, code_t], axis=-1)
    for w_eff, b in params:
        K = w_eff.shape[0]
        p = (K - 1) // 2
        xp = jnp.pad(x, ((0, 0), (p, p), (0, 0)))
        L = x.shape[1]
        acc = sum(jnp.einsum('blc,cd->bld', xp[:, k:k + L, :], w_eff[k],
                             precision=jax.lax.Precision.HIGHEST) for k in range(K))
        x = acc + b[None, None, :]
        if activation == 'Relu':
            x = jnp.maximum(x, 0.0)
        elif activation == 'Tanh':
            x = jnp.tanh(x)
    return jnp.transpose(x, (0, 2, 1))


if __name__ == "__main__":
    B, L, Dim, nChannels = 2, 8, 32, 1
    key = jax.random.PRNGKey(0)
    k_params, k_x, k_t = jax.random.split(key, 3)

    params = init_decoder_params(k_params, Dim, nChannels, use_sn=False)
    code_x = jax.random.normal(k_x, (B, L, Dim), jnp.float32)
    code_t = jax.random.normal(k_t, (B, L, Dim), jnp.float32)

    # Default ('Relu') path.
    out = jax.block_until_ready(my_ts_conv_decoder2(code_x, code_t, params, activation='Relu'))
    assert out.shape == (B, nChannels, L), out.shape
    ref = jax.block_until_ready(_reference(code_x, code_t, params, activation='Relu'))
    assert jnp.allclose(out, ref, atol=1e-4, rtol=1e-4), "Relu mismatch vs reference"

    # 'Tanh' path (looser tolerance: in-kernel tanh uses the TPU EUP approximation).
    out_t = jax.block_until_ready(my_ts_conv_decoder2(code_x, code_t, params, activation='Tanh'))
    ref_t = jax.block_until_ready(_reference(code_x, code_t, params, activation='Tanh'))
    assert jnp.allclose(out_t, ref_t, atol=1e-2, rtol=1e-2), "Tanh mismatch vs reference"

    print("KERNEL_OK")
</pallas_src>

<mosaic_0001>
module attributes {stable_mosaic.version = 11 : i64} {
  func.func @_decoder_kernel(%arg0: i32, %arg1: memref<1x8x32xf32, #tpu.memory_space<vmem>>, %arg2: memref<1x8x32xf32, #tpu.memory_space<vmem>>, %arg3: memref<192x8xf32, #tpu.memory_space<vmem>>, %arg4: memref<1x8xf32, #tpu.memory_space<vmem>>, %arg5: memref<104x8xf32, #tpu.memory_space<vmem>>, %arg6: memref<1x8xf32, #tpu.memory_space<vmem>>, %arg7: memref<24x8xf32, #tpu.memory_space<vmem>>, %arg8: memref<1x8xf32, #tpu.memory_space<vmem>>, %arg9: memref<40x8xf32, #tpu.memory_space<vmem>>, %arg10: memref<1x8xf32, #tpu.memory_space<vmem>>, %arg11: memref<24x1xf32, #tpu.memory_space<vmem>>, %arg12: memref<1x1xf32, #tpu.memory_space<vmem>>, %arg13: memref<1x8x1xf32, #tpu.memory_space<vmem>>, %arg14: memref<8x192xf32, #tpu.memory_space<vmem>>) attributes {dimension_semantics = [#tpu.dimension_semantics<parallel>], iteration_bounds = array<i64: 2>, scalar_prefetch = 0 : i64, scratch_operands = 1 : i64, tpu.core_type = #tpu.core_type<tc>, window_params = [{transform_indices = @transform_0, window_bounds = array<i64: 1, 8, 32>}, {transform_indices = @transform_1, window_bounds = array<i64: 1, 8, 32>}, {pipeline_mode = #tpu.pipeline_mode<synchronous>, transform_indices = @transform_2, window_bounds = array<i64: 192, 8>}, {pipeline_mode = #tpu.pipeline_mode<synchronous>, transform_indices = @transform_3, window_bounds = array<i64: 1, 8>}, {pipeline_mode = #tpu.pipeline_mode<synchronous>, transform_indices = @transform_4, window_bounds = array<i64: 104, 8>}, {pipeline_mode = #tpu.pipeline_mode<synchronous>, transform_indices = @transform_5, window_bounds = array<i64: 1, 8>}, {pipeline_mode = #tpu.pipeline_mode<synchronous>, transform_indices = @transform_6, window_bounds = array<i64: 24, 8>}, {pipeline_mode = #tpu.pipeline_mode<synchronous>, transform_indices = @transform_7, window_bounds = array<i64: 1, 8>}, {pipeline_mode = #tpu.pipeline_mode<synchronous>, transform_indices = @transform_8, window_bounds = array<i64: 40, 8>}, {pipeline_mode = #tpu.pipeline_mode<synchronous>, transform_indices = @transform_9, window_bounds = array<i64: 1, 8>}, {pipeline_mode = #tpu.pipeline_mode<synchronous>, transform_indices = @transform_10, window_bounds = array<i64: 24, 1>}, {pipeline_mode = #tpu.pipeline_mode<synchronous>, transform_indices = @transform_11, window_bounds = array<i64: 1, 1>}, {transform_indices = @transform_12, window_bounds = array<i64: 1, 8, 1>}]} {
    %c0 = arith.constant 0 : index
    %c0_0 = arith.constant 0 : index
    %c0_1 = arith.constant 0 : index
    %0 = vector.load %arg1[%c0, %c0_0, %c0_1] : memref<1x8x32xf32, #tpu.memory_space<vmem>>, vector<1x8x32xf32>
    %1 = vector.shape_cast %0 : vector<1x8x32xf32> to vector<8x32xf32>
    %c0_2 = arith.constant 0 : index
    %c0_3 = arith.constant 0 : index
    %c0_4 = arith.constant 0 : index
    %2 = vector.load %arg2[%c0_2, %c0_3, %c0_4] : memref<1x8x32xf32, #tpu.memory_space<vmem>>, vector<1x8x32xf32>
    %3 = vector.shape_cast %2 : vector<1x8x32xf32> to vector<8x32xf32>
    %cst = arith.constant 0.000000e+00 : f32
    %4 = vector.broadcast %cst : f32 to vector<8x192xf32>
    %c0_5 = arith.constant 0 : index
    %c0_6 = arith.constant 0 : index
    %5 = vector.load %arg14[%c0_5, %c0_6] : memref<8x192xf32, #tpu.memory_space<vmem>>, vector<8x192xf32>
    tpu.vector_store %arg14[%c0_5, %c0_6], %4 {strides = array<i32>} : memref<8x192xf32, #tpu.memory_space<vmem>>, vector<8x192xf32>,
    %6 = vector.extract_strided_slice %1 {offsets = [0, 0], sizes = [7, 32], strides = [1, 1]} : vector<8x32xf32> to vector<7x32xf32>
    %c1 = arith.constant 1 : index
    %c0_7 = arith.constant 0 : index
    %7 = vector.load %arg14[%c1, %c0_7] : memref<8x192xf32, #tpu.memory_space<vmem>>, vector<7x32xf32>
    tpu.vector_store %arg14[%c1, %c0_7], %6 {strides = array<i32>} : memref<8x192xf32, #tpu.memory_space<vmem>>, vector<7x32xf32>,
    %8 = vector.extract_strided_slice %3 {offsets = [0, 0], sizes = [7, 32], strides = [1, 1]} : vector<8x32xf32> to vector<7x32xf32>
    %c1_8 = arith.constant 1 : index
    %c32 = arith.constant 32 : index
    %9 = vector.load %arg14[%c1_8, %c32] : memref<8x192xf32, #tpu.memory_space<vmem>>, vector<7x32xf32>
    tpu.vector_store %arg14[%c1_8, %c32], %8 {strides = array<i32>} : memref<8x192xf32, #tpu.memory_space<vmem>>, vector<7x32xf32>,
    %c0_9 = arith.constant 0 : index
    %c64 = arith.constant 64 : index
    %10 = vector.load %arg14[%c0_9, %c64] : memref<8x192xf32, #tpu.memory_space<vmem>>, vector<8x32xf32>
    tpu.vector_store %arg14[%c0_9, %c64], %1 {strides = array<i32>} : memref<8x192xf32, #tpu.memory_space<vmem>>, vector<8x32xf32>,
    %c0_10 = arith.constant 0 : index
    %c96 = arith.constant 96 : index
    %11 = vector.load %arg14[%c0_10, %c96] : memref<8x192xf32, #tpu.memory_space<vmem>>, vector<8x32xf32>
    tpu.vector_store %arg14[%c0_10, %c96], %3 {strides = array<i32>} : memref<8x192xf32, #tpu.memory_space<vmem>>, vector<8x32xf32>,
    %12 = vector.extract_strided_slice %1 {offsets = [1, 0], sizes = [7, 32], strides = [1, 1]} : vector<8x32xf32> to vector<7x32xf32>
    %c0_11 = arith.constant 0 : index
    %c128 = arith.constant 128 : index
    %13 = vector.load %arg14[%c0_11, %c128] : memref<8x192xf32, #tpu.memory_space<vmem>>, vector<7x32xf32>
    tpu.vector_store %arg14[%c0_11, %c128], %12 {strides = array<i32>} : memref<8x192xf32, #tpu.memory_space<vmem>>, vector<7x32xf32>,
    %14 = vector.extract_strided_slice %3 {offsets = [1, 0], sizes = [7, 32], strides = [1, 1]} : vector<8x32xf32> to vector<7x32xf32>
    %c0_12 = arith.constant 0 : index
    %c160 = arith.constant 160 : index
    %15 = vector.load %arg14[%c0_12, %c160] : memref<8x192xf32, #tpu.memory_space<vmem>>, vector<7x32xf32>
    tpu.vector_store %arg14[%c0_12, %c160], %14 {strides = array<i32>} : memref<8x192xf32, #tpu.memory_space<vmem>>, vector<7x32xf32>,
    %c0_13 = arith.constant 0 : index
    %c0_14 = arith.constant 0 : index
    %16 = vector.load %arg14[%c0_13, %c0_14] : memref<8x192xf32, #tpu.memory_space<vmem>>, vector<8x192xf32>
    %c0_15 = arith.constant 0 : index
    %c0_16 = arith.constant 0 : index
    %17 = vector.load %arg3[%c0_15, %c0_16] : memref<192x8xf32, #tpu.memory_space<vmem>>, vector<192x8xf32>
    %cst_17 = arith.constant dense<0.000000e+00> : vector<8x8xf32>
    %18 = tpu.matmul %16, %17, %cst_17 {dimension_numbers = #tpu.dot_dimension_numbers<[1], [0], [0], [1], [0, 0, 1, 1], [], []>} : vector<8x192xf32>, vector<192x8xf32>, vector<8x8xf32> -> vector<8x8xf32>
    %c0_18 = arith.constant 0 : index
    %c0_19 = arith.constant 0 : index
    %19 = vector.load %arg4[%c0_18, %c0_19] : memref<1x8xf32, #tpu.memory_space<vmem>>, vector<1x8xf32>
    %20 = vector.broadcast %19 : vector<1x8xf32> to vector<8x8xf32>
    %21 = arith.addf %18, %20 : vector<8x8xf32>
    %cst_20 = arith.constant 0.000000e+00 : f32
    %22 = vector.broadcast %cst_20 : f32 to vector<8x8xf32>
    %23 = arith.maximumf %21, %22 : vector<8x8xf32>
    %cst_21 = arith.constant 0.000000e+00 : f32
    %24 = vector.broadcast %cst_21 : f32 to vector<8x192xf32>
    %c0_22 = arith.constant 0 : index
    %c0_23 = arith.constant 0 : index
    %25 = vector.load %arg14[%c0_22, %c0_23] : memref<8x192xf32, #tpu.memory_space<vmem>>, vector<8x192xf32>
    tpu.vector_store %arg14[%c0_22, %c0_23], %24 {strides = array<i32>} : memref<8x192xf32, #tpu.memory_space<vmem>>, vector<8x192xf32>,
    %26 = vector.extract_strided_slice %23 {offsets = [0, 0], sizes = [2, 8], strides = [1, 1]} : vector<8x8xf32> to vector<2x8xf32>
    %c6 = arith.constant 6 : index
    %c0_24 = arith.constant 0 : index
    %27 = vector.load %arg14[%c6, %c0_24] : memref<8x192xf32, #tpu.memory_space<vmem>>, vector<2x8xf32>
    tpu.vector_store %arg14[%c6, %c0_24], %26 {strides = array<i32>} : memref<8x192xf32, #tpu.memory_space<vmem>>, vector<2x8xf32>,
    %28 = vector.extract_strided_slice %23 {offsets = [0, 0], sizes = [3, 8], strides = [1, 1]} : vector<8x8xf32> to vector<3x8xf32>
    %c5 = arith.constant 5 : index
    %c8 = arith.constant 8 : index
    %29 = vector.load %arg14[%c5, %c8] : memref<8x192xf32, #tpu.memory_space<vmem>>, vector<3x8xf32>
    tpu.vector_store %arg14[%c5, %c8], %28 {strides = array<i32>} : memref<8x192xf32, #tpu.memory_space<vmem>>, vector<3x8xf32>,
    %30 = vector.extract_strided_slice %23 {offsets = [0, 0], sizes = [4, 8], strides = [1, 1]} : vector<8x8xf32> to vector<4x8xf32>
    %c4 = arith.constant 4 : index
    %c16 = arith.constant 16 : index
    %31 = vector.load %arg14[%c4, %c16] : memref<8x192xf32, #tpu.memory_space<vmem>>, vector<4x8xf32>
    tpu.vector_store %arg14[%c4, %c16], %30 {strides = array<i32>} : memref<8x192xf32, #tpu.memory_space<vmem>>, vector<4x8xf32>,
    %32 = vector.extract_strided_slice %23 {offsets = [0, 0], sizes = [5, 8], strides = [1, 1]} : vector<8x8xf32> to vector<5x8xf32>
    %c3 = arith.constant 3 : index
    %c24 = arith.constant 24 : index
    %33 = vector.load %arg14[%c3, %c24] : memref<8x192xf32, #tpu.memory_space<vmem>>, vector<5x8xf32>
    tpu.vector_store %arg14[%c3, %c24], %32 {strides = array<i32>} : memref<8x192xf32, #tpu.memory_space<vmem>>, vector<5x8xf32>,
    %34 = vector.extract_strided_slice %23 {offsets = [0, 0], sizes = [6, 8], strides = [1, 1]} : vector<8x8xf32> to vector<6x8xf32>
    %c2 = arith.constant 2 : index
    %c32_25 = arith.constant 32 : index
    %35 = vector.load %arg14[%c2, %c32_25] : memref<8x192xf32, #tpu.memory_space<vmem>>, vector<6x8xf32>
    tpu.vector_store %arg14[%c2, %c32_25], %34 {strides = array<i32>} : memref<8x192xf32, #tpu.memory_space<vmem>>, vector<6x8xf32>,
    %36 = vector.extract_strided_slice %23 {offsets = [0, 0], sizes = [7, 8], strides = [1, 1]} : vector<8x8xf32> to vector<7x8xf32>
    %c1_26 = arith.constant 1 : index
    %c40 = arith.constant 40 : index
    %37 = vector.load %arg14[%c1_26, %c40] : memref<8x192xf32, #tpu.memory_space<vmem>>, vector<7x8xf32>
    tpu.vector_store %arg14[%c1_26, %c40], %36 {strides = array<i32>} : memref<8x192xf32, #tpu.memory_space<vmem>>, vector<7x8xf32>,
    %c0_27 = arith.constant 0 : index
    %c48 = arith.constant 48 : index
    %38 = vector.load %arg14[%c0_27, %c48] : memref<8x192xf32, #tpu.memory_space<vmem>>, vector<8x8xf32>
    tpu.vector_store %arg14[%c0_27, %c48], %23 {strides = array<i32>} : memref<8x192xf32, #tpu.memory_space<vmem>>, vector<8x8xf32>,
    %39 = vector.extract_strided_slice %23 {offsets = [1, 0], sizes = [7, 8], strides = [1, 1]} : vector<8x8xf32> to vector<7x8xf32>
    %c0_28 = arith.constant 0 : index
    %c56 = arith.constant 56 : index
    %40 = vector.load %arg14[%c0_28, %c56] : memref<8x192xf32, #tpu.memory_space<vmem>>, vector<7x8xf32>
    tpu.vector_store %arg14[%c0_28, %c56], %39 {strides = array<i32>} : memref<8x192xf32, #tpu.memory_space<vmem>>, vector<7x8xf32>,
    %41 = vector.extract_strided_slice %23 {offsets = [2, 0], sizes = [6, 8], strides = [1, 1]} : vector<8x8xf32> to vector<6x8xf32>
    %c0_29 = arith.constant 0 : index
    %c64_30 = arith.constant 64 : index
    %42 = vector.load %arg14[%c0_29, %c64_30] : memref<8x192xf32, #tpu.memory_space<vmem>>, vector<6x8xf32>
    tpu.vector_store %arg14[%c0_29, %c64_30], %41 {strides = array<i32>} : memref<8x192xf32, #tpu.memory_space<vmem>>, vector<6x8xf32>,
    %43 = vector.extract_strided_slice %23 {offsets = [3, 0], sizes = [5, 8], strides = [1, 1]} : vector<8x8xf32> to vector<5x8xf32>
    %c0_31 = arith.constant 0 : index
    %c72 = arith.constant 72 : index
    %44 = vector.load %arg14[%c0_31, %c72] : memref<8x192xf32, #tpu.memory_space<vmem>>, vector<5x8xf32>
    tpu.vector_store %arg14[%c0_31, %c72], %43 {strides = array<i32>} : memref<8x192xf32, #tpu.memory_space<vmem>>, vector<5x8xf32>,
    %45 = vector.extract_strided_slice %23 {offsets = [4, 0], sizes = [4, 8], strides = [1, 1]} : vector<8x8xf32> to vector<4x8xf32>
    %c0_32 = arith.constant 0 : index
    %c80 = arith.constant 80 : index
    %46 = vector.load %arg14[%c0_32, %c80] : memref<8x192xf32, #tpu.memory_space<vmem>>, vector<4x8xf32>
    tpu.vector_store %arg14[%c0_32, %c80], %45 {strides = array<i32>} : memref<8x192xf32, #tpu.memory_space<vmem>>, vector<4x8xf32>,
    %47 = vector.extract_strided_slice %23 {offsets = [5, 0], sizes = [3, 8], strides = [1, 1]} : vector<8x8xf32> to vector<3x8xf32>
    %c0_33 = arith.constant 0 : index
    %c88 = arith.constant 88 : index
    %48 = vector.load %arg14[%c0_33, %c88] : memref<8x192xf32, #tpu.memory_space<vmem>>, vector<3x8xf32>
    tpu.vector_store %arg14[%c0_33, %c88], %47 {strides = array<i32>} : memref<8x192xf32, #tpu.memory_space<vmem>>, vector<3x8xf32>,
    %49 = vector.extract_strided_slice %23 {offsets = [6, 0], sizes = [2, 8], strides = [1, 1]} : vector<8x8xf32> to vector<2x8xf32>
    %c0_34 = arith.constant 0 : index
    %c96_35 = arith.constant 96 : index
    %50 = vector.load %arg14[%c0_34, %c96_35] : memref<8x192xf32, #tpu.memory_space<vmem>>, vector<2x8xf32>
    tpu.vector_store %arg14[%c0_34, %c96_35], %49 {strides = array<i32>} : memref<8x192xf32, #tpu.memory_space<vmem>>, vector<2x8xf32>,
    %c0_36 = arith.constant 0 : index
    %c0_37 = arith.constant 0 : index
    %51 = vector.load %arg14[%c0_36, %c0_37] : memref<8x192xf32, #tpu.memory_space<vmem>>, vector<8x104xf32>
    %c0_38 = arith.constant 0 : index
    %c0_39 = arith.constant 0 : index
    %52 = vector.load %arg5[%c0_38, %c0_39] : memref<104x8xf32, #tpu.memory_space<vmem>>, vector<104x8xf32>
    %cst_40 = arith.constant dense<0.000000e+00> : vector<8x8xf32>
    %53 = tpu.matmul %51, %52, %cst_40 {dimension_numbers = #tpu.dot_dimension_numbers<[1], [0], [0], [1], [0, 0, 1, 1], [], []>} : vector<8x104xf32>, vector<104x8xf32>, vector<8x8xf32> -> vector<8x8xf32>
    %c0_41 = arith.constant 0 : index
    %c0_42 = arith.constant 0 : index
    %54 = vector.load %arg6[%c0_41, %c0_42] : memref<1x8xf32, #tpu.memory_space<vmem>>, vector<1x8xf32>
    %55 = vector.broadcast %54 : vector<1x8xf32> to vector<8x8xf32>
    %56 = arith.addf %53, %55 : vector<8x8xf32>
    %cst_43 = arith.constant 0.000000e+00 : f32
    %57 = vector.broadcast %cst_43 : f32 to vector<8x8xf32>
    %58 = arith.maximumf %56, %57 : vector<8x8xf32>
    %cst_44 = arith.constant 0.000000e+00 : f32
    %59 = vector.broadcast %cst_44 : f32 to vector<8x192xf32>
    %c0_45 = arith.constant 0 : index
    %c0_46 = arith.constant 0 : index
    %60 = vector.load %arg14[%c0_45, %c0_46] : memref<8x192xf32, #tpu.memory_space<vmem>>, vector<8x192xf32>
    tpu.vector_store %arg14[%c0_45, %c0_46], %59 {strides = array<i32>} : memref<8x192xf32, #tpu.memory_space<vmem>>, vector<8x192xf32>,
    %61 = vector.extract_strided_slice %58 {offsets = [0, 0], sizes = [7, 8], strides = [1, 1]} : vector<8x8xf32> to vector<7x8xf32>
    %c1_47 = arith.constant 1 : index
    %c0_48 = arith.constant 0 : index
    %62 = vector.load %arg14[%c1_47, %c0_48] : memref<8x192xf32, #tpu.memory_space<vmem>>, vector<7x8xf32>
    tpu.vector_store %arg14[%c1_47, %c0_48], %61 {strides = array<i32>} : memref<8x192xf32, #tpu.memory_space<vmem>>, vector<7x8xf32>,
    %c0_49 = arith.constant 0 : index
    %c8_50 = arith.constant 8 : index
    %63 = vector.load %arg14[%c0_49, %c8_50] : memref<8x192xf32, #tpu.memory_space<vmem>>, vector<8x8xf32>
    tpu.vector_store %arg14[%c0_49, %c8_50], %58 {strides = array<i32>} : memref<8x192xf32, #tpu.memory_space<vmem>>, vector<8x8xf32>,
    %64 = vector.extract_strided_slice %58 {offsets = [1, 0], sizes = [7, 8], strides = [1, 1]} : vector<8x8xf32> to vector<7x8xf32>
    %c0_51 = arith.constant 0 : index
    %c16_52 = arith.constant 16 : index
    %65 = vector.load %arg14[%c0_51, %c16_52] : memref<8x192xf32, #tpu.memory_space<vmem>>, vector<7x8xf32>
    tpu.vector_store %arg14[%c0_51, %c16_52], %64 {strides = array<i32>} : memref<8x192xf32, #tpu.memory_space<vmem>>, vector<7x8xf32>,
    %c0_53 = arith.constant 0 : index
    %c0_54 = arith.constant 0 : index
    %66 = vector.load %arg14[%c0_53, %c0_54] : memref<8x192xf32, #tpu.memory_space<vmem>>, vector<8x24xf32>
    %c0_55 = arith.constant 0 : index
    %c0_56 = arith.constant 0 : index
    %67 = vector.load %arg7[%c0_55, %c0_56] : memref<24x8xf32, #tpu.memory_space<vmem>>, vector<24x8xf32>
    %cst_57 = arith.constant dense<0.000000e+00> : vector<8x8xf32>
    %68 = tpu.matmul %66, %67, %cst_57 {dimension_numbers = #tpu.dot_dimension_numbers<[1], [0], [0], [1], [0, 0, 1, 1], [], []>} : vector<8x24xf32>, vector<24x8xf32>, vector<8x8xf32> -> vector<8x8xf32>
    %c0_58 = arith.constant 0 : index
    %c0_59 = arith.constant 0 : index
    %69 = vector.load %arg8[%c0_58, %c0_59] : memref<1x8xf32, #tpu.memory_space<vmem>>, vector<1x8xf32>
    %70 = vector.broadcast %69 : vector<1x8xf32> to vector<8x8xf32>
    %71 = arith.addf %68, %70 : vector<8x8xf32>
    %cst_60 = arith.constant 0.000000e+00 : f32
    %72 = vector.broadcast %cst_60 : f32 to vector<8x8xf32>
    %73 = arith.maximumf %71, %72 : vector<8x8xf32>
    %cst_61 = arith.constant 0.000000e+00 : f32
    %74 = vector.broadcast %cst_61 : f32 to vector<8x192xf32>
    %c0_62 = arith.constant 0 : index
    %c0_63 = arith.constant 0 : index
    %75 = vector.load %arg14[%c0_62, %c0_63] : memref<8x192xf32, #tpu.memory_space<vmem>>, vector<8x192xf32>
    tpu.vector_store %arg14[%c0_62, %c0_63], %74 {strides = array<i32>} : memref<8x192xf32, #tpu.memory_space<vmem>>, vector<8x192xf32>,
    %76 = vector.extract_strided_slice %73 {offsets = [0, 0], sizes = [6, 8], strides = [1, 1]} : vector<8x8xf32> to vector<6x8xf32>
    %c2_64 = arith.constant 2 : index
    %c0_65 = arith.constant 0 : index
    %77 = vector.load %arg14[%c2_64, %c0_65] : memref<8x192xf32, #tpu.memory_space<vmem>>, vector<6x8xf32>
    tpu.vector_store %arg14[%c2_64, %c0_65], %76 {strides = array<i32>} : memref<8x192xf32, #tpu.memory_space<vmem>>, vector<6x8xf32>,
    %78 = vector.extract_strided_slice %73 {offsets = [0, 0], sizes = [7, 8], strides = [1, 1]} : vector<8x8xf32> to vector<7x8xf32>
    %c1_66 = arith.constant 1 : index
    %c8_67 = arith.constant 8 : index
    %79 = vector.load %arg14[%c1_66, %c8_67] : memref<8x192xf32, #tpu.memory_space<vmem>>, vector<7x8xf32>
    tpu.vector_store %arg14[%c1_66, %c8_67], %78 {strides = array<i32>} : memref<8x192xf32, #tpu.memory_space<vmem>>, vector<7x8xf32>,
    %c0_68 = arith.constant 0 : index
    %c16_69 = arith.constant 16 : index
    %80 = vector.load %arg14[%c0_68, %c16_69] : memref<8x192xf32, #tpu.memory_space<vmem>>, vector<8x8xf32>
    tpu.vector_store %arg14[%c0_68, %c16_69], %73 {strides = array<i32>} : memref<8x192xf32, #tpu.memory_space<vmem>>, vector<8x8xf32>,
    %81 = vector.extract_strided_slice %73 {offsets = [1, 0], sizes = [7, 8], strides = [1, 1]} : vector<8x8xf32> to vector<7x8xf32>
    %c0_70 = arith.constant 0 : index
    %c24_71 = arith.constant 24 : index
    %82 = vector.load %arg14[%c0_70, %c24_71] : memref<8x192xf32, #tpu.memory_space<vmem>>, vector<7x8xf32>
    tpu.vector_store %arg14[%c0_70, %c24_71], %81 {strides = array<i32>} : memref<8x192xf32, #tpu.memory_space<vmem>>, vector<7x8xf32>,
    %83 = vector.extract_strided_slice %73 {offsets = [2, 0], sizes = [6, 8], strides = [1, 1]} : vector<8x8xf32> to vector<6x8xf32>
    %c0_72 = arith.constant 0 : index
    %c32_73 = arith.constant 32 : index
    %84 = vector.load %arg14[%c0_72, %c32_73] : memref<8x192xf32, #tpu.memory_space<vmem>>, vector<6x8xf32>
    tpu.vector_store %arg14[%c0_72, %c32_73], %83 {strides = array<i32>} : memref<8x192xf32, #tpu.memory_space<vmem>>, vector<6x8xf32>,
    %c0_74 = arith.constant 0 : index
    %c0_75 = arith.constant 0 : index
    %85 = vector.load %arg14[%c0_74, %c0_75] : memref<8x192xf32, #tpu.memory_space<vmem>>, vector<8x40xf32>
    %c0_76 = arith.constant 0 : index
    %c0_77 = arith.constant 0 : index
    %86 = vector.load %arg9[%c0_76, %c0_77] : memref<40x8xf32, #tpu.memory_space<vmem>>, vector<40x8xf32>
    %cst_78 = arith.constant dense<0.000000e+00> : vector<8x8xf32>
    %87 = tpu.matmul %85, %86, %cst_78 {dimension_numbers = #tpu.dot_dimension_numbers<[1], [0], [0], [1], [0, 0, 1, 1], [], []>} : vector<8x40xf32>, vector<40x8xf32>, vector<8x8xf32> -> vector<8x8xf32>
    %c0_79 = arith.constant 0 : index
    %c0_80 = arith.constant 0 : index
    %88 = vector.load %arg10[%c0_79, %c0_80] : memref<1x8xf32, #tpu.memory_space<vmem>>, vector<1x8xf32>
    %89 = vector.broadcast %88 : vector<1x8xf32> to vector<8x8xf32>
    %90 = arith.addf %87, %89 : vector<8x8xf32>
    %cst_81 = arith.constant 0.000000e+00 : f32
    %91 = vector.broadcast %cst_81 : f32 to vector<8x8xf32>
    %92 = arith.maximumf %90, %91 : vector<8x8xf32>
    %cst_82 = arith.constant 0.000000e+00 : f32
    %93 = vector.broadcast %cst_82 : f32 to vector<8x192xf32>
    %c0_83 = arith.constant 0 : index
    %c0_84 = arith.constant 0 : index
    %94 = vector.load %arg14[%c0_83, %c0_84] : memref<8x192xf32, #tpu.memory_space<vmem>>, vector<8x192xf32>
    tpu.vector_store %arg14[%c0_83, %c0_84], %93 {strides = array<i32>} : memref<8x192xf32, #tpu.memory_space<vmem>>, vector<8x192xf32>,
    %95 = vector.extract_strided_slice %92 {offsets = [0, 0], sizes = [7, 8], strides = [1, 1]} : vector<8x8xf32> to vector<7x8xf32>
    %c1_85 = arith.constant 1 : index
    %c0_86 = arith.constant 0 : index
    %96 = vector.load %arg14[%c1_85, %c0_86] : memref<8x192xf32, #tpu.memory_space<vmem>>, vector<7x8xf32>
    tpu.vector_store %arg14[%c1_85, %c0_86], %95 {strides = array<i32>} : memref<8x192xf32, #tpu.memory_space<vmem>>, vector<7x8xf32>,
    %c0_87 = arith.constant 0 : index
    %c8_88 = arith.constant 8 : index
    %97 = vector.load %arg14[%c0_87, %c8_88] : memref<8x192xf32, #tpu.memory_space<vmem>>, vector<8x8xf32>
    tpu.vector_store %arg14[%c0_87, %c8_88], %92 {strides = array<i32>} : memref<8x192xf32, #tpu.memory_space<vmem>>, vector<8x8xf32>,
    %98 = vector.extract_strided_slice %92 {offsets = [1, 0], sizes = [7, 8], strides = [1, 1]} : vector<8x8xf32> to vector<7x8xf32>
    %c0_89 = arith.constant 0 : index
    %c16_90 = arith.constant 16 : index
    %99 = vector.load %arg14[%c0_89, %c16_90] : memref<8x192xf32, #tpu.memory_space<vmem>>, vector<7x8xf32>
    tpu.vector_store %arg14[%c0_89, %c16_90], %98 {strides = array<i32>} : memref<8x192xf32, #tpu.memory_space<vmem>>, vector<7x8xf32>,
    %c0_91 = arith.constant 0 : index
    %c0_92 = arith.constant 0 : index
    %100 = vector.load %arg14[%c0_91, %c0_92] : memref<8x192xf32, #tpu.memory_space<vmem>>, vector<8x24xf32>
    %c0_93 = arith.constant 0 : index
    %c0_94 = arith.constant 0 : index
    %101 = vector.load %arg11[%c0_93, %c0_94] : memref<24x1xf32, #tpu.memory_space<vmem>>, vector<24x1xf32>
    %cst_95 = arith.constant dense<0.000000e+00> : vector<8x1xf32>
    %102 = tpu.matmul %100, %101, %cst_95 {dimension_numbers = #tpu.dot_dimension_numbers<[1], [0], [0], [1], [0, 0, 1, 1], [], []>} : vector<8x24xf32>, vector<24x1xf32>, vector<8x1xf32> -> vector<8x1xf32>
    %c0_96 = arith.constant 0 : index
    %c0_97 = arith.constant 0 : index
    %103 = vector.load %arg12[%c0_96, %c0_97] : memref<1x1xf32, #tpu.memory_space<vmem>>, vector<1x1xf32>
    %104 = vector.broadcast %103 : vector<1x1xf32> to vector<8x1xf32>
    %105 = arith.addf %102, %104 : vector<8x1xf32>
    %cst_98 = arith.constant 0.000000e+00 : f32
    %106 = vector.broadcast %cst_98 : f32 to vector<8x1xf32>
    %107 = arith.maximumf %105, %106 : vector<8x1xf32>
    %c0_99 = arith.constant 0 : index
    %c0_100 = arith.constant 0 : index
    %c0_101 = arith.constant 0 : index
    %108 = vector.load %arg13[%c0_99, %c0_100, %c0_101] : memref<1x8x1xf32, #tpu.memory_space<vmem>>, vector<1x8x1xf32>
    %109 = vector.shape_cast %108 : vector<1x8x1xf32> to vector<8x1xf32>
    %110 = vector.shape_cast %107 : vector<8x1xf32> to vector<1x8x1xf32>
    tpu.vector_store %arg13[%c0_99, %c0_100, %c0_101], %110 {strides = array<i32>} : memref<1x8x1xf32, #tpu.memory_space<vmem>>, vector<1x8x1xf32>,
    return
  }
  func.func @transform_0(%arg0: i32) -> (i32, i32, i32) {
    %c0_i32 = arith.constant 0 : i32
    %c0_i32_0 = arith.constant 0 : i32
    %c0_i32_1 = arith.constant 0 : i32
    return %arg0, %c0_i32, %c0_i32_0 : i32, i32, i32
  }
  func.func @transform_1(%arg0: i32) -> (i32, i32, i32) {
    %c0_i32 = arith.constant 0 : i32
    %c0_i32_0 = arith.constant 0 : i32
    %c0_i32_1 = arith.constant 0 : i32
    return %arg0, %c0_i32, %c0_i32_0 : i32, i32, i32
  }
  func.func @transform_2(%arg0: i32) -> (i32, i32) {
    %c0_i32 = arith.constant 0 : i32
    %c0_i32_0 = arith.constant 0 : i32
    %c0_i32_1 = arith.constant 0 : i32
    return %c0_i32, %c0_i32_0 : i32, i32
  }
  func.func @transform_3(%arg0: i32) -> (i32, i32) {
    %c0_i32 = arith.constant 0 : i32
    %c0_i32_0 = arith.constant 0 : i32
    %c0_i32_1 = arith.constant 0 : i32
    return %c0_i32, %c0_i32_0 : i32, i32
  }
  func.func @transform_4(%arg0: i32) -> (i32, i32) {
    %c0_i32 = arith.constant 0 : i32
    %c0_i32_0 = arith.constant 0 : i32
    %c0_i32_1 = arith.constant 0 : i32
    return %c0_i32, %c0_i32_0 : i32, i32
  }
  func.func @transform_5(%arg0: i32) -> (i32, i32) {
    %c0_i32 = arith.constant 0 : i32
    %c0_i32_0 = arith.constant 0 : i32
    %c0_i32_1 = arith.constant 0 : i32
    return %c0_i32, %c0_i32_0 : i32, i32
  }
  func.func @transform_6(%arg0: i32) -> (i32, i32) {
    %c0_i32 = arith.constant 0 : i32
    %c0_i32_0 = arith.constant 0 : i32
    %c0_i32_1 = arith.constant 0 : i32
    return %c0_i32, %c0_i32_0 : i32, i32
  }
  func.func @transform_7(%arg0: i32) -> (i32, i32) {
    %c0_i32 = arith.constant 0 : i32
    %c0_i32_0 = arith.constant 0 : i32
    %c0_i32_1 = arith.constant 0 : i32
    return %c0_i32, %c0_i32_0 : i32, i32
  }
  func.func @transform_8(%arg0: i32) -> (i32, i32) {
    %c0_i32 = arith.constant 0 : i32
    %c0_i32_0 = arith.constant 0 : i32
    %c0_i32_1 = arith.constant 0 : i32
    return %c0_i32, %c0_i32_0 : i32, i32
  }
  func.func @transform_9(%arg0: i32) -> (i32, i32) {
    %c0_i32 = arith.constant 0 : i32
    %c0_i32_0 = arith.constant 0 : i32
    %c0_i32_1 = arith.constant 0 : i32
    return %c0_i32, %c0_i32_0 : i32, i32
  }
  func.func @transform_10(%arg0: i32) -> (i32, i32) {
    %c0_i32 = arith.constant 0 : i32
    %c0_i32_0 = arith.constant 0 : i32
    %c0_i32_1 = arith.constant 0 : i32
    return %c0_i32, %c0_i32_0 : i32, i32
  }
  func.func @transform_11(%arg0: i32) -> (i32, i32) {
    %c0_i32 = arith.constant 0 : i32
    %c0_i32_0 = arith.constant 0 : i32
    %c0_i32_1 = arith.constant 0 : i32
    return %c0_i32, %c0_i32_0 : i32, i32
  }
  func.func @transform_12(%arg0: i32) -> (i32, i32, i32) {
    %c0_i32 = arith.constant 0 : i32
    %c0_i32_0 = arith.constant 0 : i32
    %c0_i32_1 = arith.constant 0 : i32
    return %arg0, %c0_i32, %c0_i32_0 : i32, i32, i32
  }
}

</mosaic_0001>

<llo_original>
// kernel: tpu_custom_call.1
$region0: #{tpu_custom_call.1}
  #allocation0 [shape = 'u32[]', space=smem, size = 0x4, offset = 0x4, fixed_abs, tag = 'smem constant byte address 0x4 - core index']
  #allocation1 [shape = 'u32[144,128]{1,0:T(1,128)}', space=vmem, size = 0x12000, scoped, tag = 'internal scratch']
  #allocation2 [shape = 'f32[8,192]{1,0:T(8,128)}', space=vmem, size = 0x2000, scoped, tag = 'scratch operand']
  #allocation3 [shape = 'f32[1,1]{1,0:T(1,128)S(1)}', space=vmem, size = 0x200, scoped, tag = 'scoped memory for tpu_custom_call.1']
  %s0 = inlined_call_operand.vmem [shape: f32[2,8,32], index: 0, kind: input, shape index: {}]
  %s1 = inlined_call_operand.vmem [shape: f32[2,8,32], index: 1, kind: input, shape index: {}]
  %s2 = inlined_call_operand.vmem [shape: f32[192,8], index: 2, kind: input, shape index: {}]
  %s3 = inlined_call_operand.vmem [shape: f32[1,8], index: 3, kind: input, shape index: {}]
  %s4 = inlined_call_operand.vmem [shape: f32[104,8], index: 4, kind: input, shape index: {}]
  %s5 = inlined_call_operand.vmem [shape: f32[1,8], index: 5, kind: input, shape index: {}]
  %s6 = inlined_call_operand.vmem [shape: f32[24,8], index: 6, kind: input, shape index: {}]
  %s7 = inlined_call_operand.vmem [shape: f32[1,8], index: 7, kind: input, shape index: {}]
  %s8 = inlined_call_operand.vmem [shape: f32[40,8], index: 8, kind: input, shape index: {}]
  %s9 = inlined_call_operand.vmem [shape: f32[1,8], index: 9, kind: input, shape index: {}]
  %s10 = inlined_call_operand.vmem [shape: f32[24,1], index: 10, kind: input, shape index: {}]
  %s11 = inlined_call_operand.<no memory space> [shape: f32[1,1], index: 11, kind: input, shape index: {}]
  %s12 = inlined_call_operand.vmem [shape: f32[2,8,1], index: 12, kind: output, shape index: {}]
  %s13 = sld [smem:[#allocation0]]
  $region81: #{tpu_custom_call.1} parent=0
    _
  %s15 = ssub.s32 1, %s13
  %s16 = scalar_select 0, %s15, %s13
  %v17 = vstv %s11
  %18 = vst [vmem:[#allocation3] sm:$0x1] %v17
  loop: start=0, step=1, limit=4
  $region2: #{tpu_custom_call.1} parent=0 // loop_pre_header
    _
  $region3: #{tpu_custom_call.1} parent=0 // loop_header
    %s20 = sphi 0, %s24
    %p21 = scmp.ge.s32.totalorder %s20, 4
    %s30 = sphi 0, %s32
    %s33 = sphi 0, %s30
    %s34 = sphi 0, %s33
    %s50 = sphi 0, %s34
    %s56 = sphi 0, %s58
    %s59 = sphi 0, %s56
    %s60 = sphi 0, %s59
    %s76 = sphi 0, %s60
    %s80 = sphi 0, %s80
    %s82 = sphi 0, %s80
    %s83 = sphi 0, %s82
    %s97 = sphi 0, %s83
    %s101 = sphi 0, %s101
    %s103 = sphi 0, %s101
    %s104 = sphi 0, %s103
    %s118 = sphi 0, %s104
    %s122 = sphi 0, %s122
    %s124 = sphi 0, %s122
    %s125 = sphi 0, %s124
    %s139 = sphi 0, %s125
    %s143 = sphi 0, %s143
    %s145 = sphi 0, %s143
    %s146 = sphi 0, %s145
    %s160 = sphi 0, %s146
    %s164 = sphi 0, %s164
    %s166 = sphi 0, %s164
    %s167 = sphi 0, %s166
    %s181 = sphi 0, %s167
    %s185 = sphi 0, %s185
    %s187 = sphi 0, %s185
    %s188 = sphi 0, %s187
    %s202 = sphi 0, %s188
    %s206 = sphi 0, %s206
    %s208 = sphi 0, %s206
    %s209 = sphi 0, %s208
    %s223 = sphi 0, %s209
    %s227 = sphi 0, %s227
    %s229 = sphi 0, %s227
    %s230 = sphi 0, %s229
    %s244 = sphi 0, %s230
    %s248 = sphi 0, %s248
    %s250 = sphi 0, %s248
    %s251 = sphi 0, %s250
    %s265 = sphi 0, %s251
    %s269 = sphi 0, %s269
    %s271 = sphi 0, %s269
    %s272 = sphi 0, %s271
    %s286 = sphi 0, %s272
    %s292 = sphi 0, %s294
    %s295 = sphi 0, %s292
    %s296 = sphi 0, %s295
    %s312 = sphi 0, %s296
  $region4: #{tpu_custom_call.1} parent=0 // loop_header_branch
    %23 = sbr.rel (%p21) target = $region8
  $region5: #{tpu_custom_call.1} parent=0 // loop_body
    %s25 = ssub.s32 %s20, 1
    %s26 = ssub.s32 %s20, 2
    %s27 = sadd.s32 %s20, 1
    %s28 = ssub.s32 %s20, %s27
    %p29 = scmp.eq.s32.totalorder %s28, 0
    %s31 = sadd.s32 %s30, 1
    %s32 = scalar_select %p29, %s30, %s31
    %p35 = pneg %p29
    %p36 = scmp.eq.s32.totalorder %s20, 1
    %p37 = por %p35, %p36
    %p38 = scmp.ne.s32.totalorder %s30, %s33
    %p39 = scmp.eq.s32.totalorder %s20, 0
    %p40 = por %p38, %p39
    %p41 = scmp.ne.s32.totalorder %s30, %s33
    %p42 = scmp.eq.s32.totalorder %s25, 1
    %p43 = por %p41, %p42
    %p44 = scmp.ne.s32.totalorder %s33, %s34
    %p45 = scmp.eq.s32.totalorder %s25, 0
    %p46 = por %p44, %p45
    %p47 = scmp.ne.s32.totalorder %s33, %s34
    %p48 = scmp.eq.s32.totalorder %s26, 1
    %p49 = por %p47, %p48
    %p51 = scmp.ne.s32.totalorder %s34, %s50
    %p52 = scmp.eq.s32.totalorder %s26, 0
    %p53 = por %p51, %p52
    %s54 = ssub.s32 %s20, %s27
    %p55 = scmp.eq.s32.totalorder %s54, 0
    %s57 = sadd.s32 %s56, 1
    %s58 = scalar_select %p55, %s56, %s57
    %p61 = pneg %p55
    %p62 = scmp.eq.s32.totalorder %s20, 1
    %p63 = por %p61, %p62
    %p64 = scmp.ne.s32.totalorder %s56, %s59
    %p65 = scmp.eq.s32.totalorder %s20, 0
    %p66 = por %p64, %p65
    %p67 = scmp.ne.s32.totalorder %s56, %s59
    %p68 = scmp.eq.s32.totalorder %s25, 1
    %p69 = por %p67, %p68
    %p70 = scmp.ne.s32.totalorder %s59, %s60
    %p71 = scmp.eq.s32.totalorder %s25, 0
    %p72 = por %p70, %p71
    %p73 = scmp.ne.s32.totalorder %s59, %s60
    %p74 = scmp.eq.s32.totalorder %s26, 1
    %p75 = por %p73, %p74
    %p77 = scmp.ne.s32.totalorder %s60, %s76
    %p78 = scmp.eq.s32.totalorder %s26, 0
    %p79 = por %p77, %p78
    %s81 = sadd.s32 %s80, 1
    %p84 = scmp.eq.s32.totalorder %s20, 1
    %p85 = scmp.ne.s32.totalorder %s80, %s82
    %p86 = scmp.eq.s32.totalorder %s20, 0
    %p87 = por %p85, %p86
    %p88 = scmp.ne.s32.totalorder %s80, %s82
    %p89 = scmp.eq.s32.totalorder %s25, 1
    %p90 = por %p88, %p89
    %p91 = scmp.ne.s32.totalorder %s82, %s83
    %p92 = scmp.eq.s32.totalorder %s25, 0
    %p93 = por %p91, %p92
    %p94 = scmp.ne.s32.totalorder %s82, %s83
    %p95 = scmp.eq.s32.totalorder %s26, 1
    %p96 = por %p94, %p95
    %p98 = scmp.ne.s32.totalorder %s83, %s97
    %p99 = scmp.eq.s32.totalorder %s26, 0
    %p100 = por %p98, %p99
    %s102 = sadd.s32 %s101, 1
    %p105 = scmp.eq.s32.totalorder %s20, 1
    %p106 = scmp.ne.s32.totalorder %s101, %s103
    %p107 = scmp.eq.s32.totalorder %s20, 0
    %p108 = por %p106, %p107
    %p109 = scmp.ne.s32.totalorder %s101, %s103
    %p110 = scmp.eq.s32.totalorder %s25, 1
    %p111 = por %p109, %p110
    %p112 = scmp.ne.s32.totalorder %s103, %s104
    %p113 = scmp.eq.s32.totalorder %s25, 0
    %p114 = por %p112, %p113
    %p115 = scmp.ne.s32.totalorder %s103, %s104
    %p116 = scmp.eq.s32.totalorder %s26, 1
    %p117 = por %p115, %p116
    %p119 = scmp.ne.s32.totalorder %s104, %s118
    %p120 = scmp.eq.s32.totalorder %s26, 0
    %p121 = por %p119, %p120
    %s123 = sadd.s32 %s122, 1
    %p126 = scmp.eq.s32.totalorder %s20, 1
    %p127 = scmp.ne.s32.totalorder %s122, %s124
    %p128 = scmp.eq.s32.totalorder %s20, 0
    %p129 = por %p127, %p128
    %p130 = scmp.ne.s32.totalorder %s122, %s124
    %p131 = scmp.eq.s32.totalorder %s25, 1
    %p132 = por %p130, %p131
    %p133 = scmp.ne.s32.totalorder %s124, %s125
    %p134 = scmp.eq.s32.totalorder %s25, 0
    %p135 = por %p133, %p134
    %p136 = scmp.ne.s32.totalorder %s124, %s125
    %p137 = scmp.eq.s32.totalorder %s26, 1
    %p138 = por %p136, %p137
    %p140 = scmp.ne.s32.totalorder %s125, %s139
    %p141 = scmp.eq.s32.totalorder %s26, 0
    %p142 = por %p140, %p141
    %s144 = sadd.s32 %s143, 1
    %p147 = scmp.eq.s32.totalorder %s20, 1
    %p148 = scmp.ne.s32.totalorder %s143, %s145
    %p149 = scmp.eq.s32.totalorder %s20, 0
    %p150 = por %p148, %p149
    %p151 = scmp.ne.s32.totalorder %s143, %s145
    %p152 = scmp.eq.s32.totalorder %s25, 1
    %p153 = por %p151, %p152
    %p154 = scmp.ne.s32.totalorder %s145, %s146
    %p155 = scmp.eq.s32.totalorder %s25, 0
    %p156 = por %p154, %p155
    %p157 = scmp.ne.s32.totalorder %s145, %s146
    %p158 = scmp.eq.s32.totalorder %s26, 1
    %p159 = por %p157, %p158
    %p161 = scmp.ne.s32.totalorder %s146, %s160
    %p162 = scmp.eq.s32.totalorder %s26, 0
    %p163 = por %p161, %p162
    %s165 = sadd.s32 %s164, 1
    %p168 = scmp.eq.s32.totalorder %s20, 1
    %p169 = scmp.ne.s32.totalorder %s164, %s166
    %p170 = scmp.eq.s32.totalorder %s20, 0
    %p171 = por %p169, %p170
    %p172 = scmp.ne.s32.totalorder %s164, %s166
    %p173 = scmp.eq.s32.totalorder %s25, 1
    %p174 = por %p172, %p173
    %p175 = scmp.ne.s32.totalorder %s166, %s167
    %p176 = scmp.eq.s32.totalorder %s25, 0
    %p177 = por %p175, %p176
    %p178 = scmp.ne.s32.totalorder %s166, %s167
    %p179 = scmp.eq.s32.totalorder %s26, 1
    %p180 = por %p178, %p179
    %p182 = scmp.ne.s32.totalorder %s167, %s181
    %p183 = scmp.eq.s32.totalorder %s26, 0
    %p184 = por %p182, %p183
    %s186 = sadd.s32 %s185, 1
    %p189 = scmp.eq.s32.totalorder %s20, 1
    %p190 = scmp.ne.s32.totalorder %s185, %s187
    %p191 = scmp.eq.s32.totalorder %s20, 0
    %p192 = por %p190, %p191
    %p193 = scmp.ne.s32.totalorder %s185, %s187
    %p194 = scmp.eq.s32.totalorder %s25, 1
    %p195 = por %p193, %p194
    %p196 = scmp.ne.s32.totalorder %s187, %s188
    %p197 = scmp.eq.s32.totalorder %s25, 0
    %p198 = por %p196, %p197
    %p199 = scmp.ne.s32.totalorder %s187, %s188
    %p200 = scmp.eq.s32.totalorder %s26, 1
    %p201 = por %p199, %p200
    %p203 = scmp.ne.s32.totalorder %s188, %s202
    %p204 = scmp.eq.s32.totalorder %s26, 0
    %p205 = por %p203, %p204
    %s207 = sadd.s32 %s206, 1
    %p210 = scmp.eq.s32.totalorder %s20, 1
    %p211 = scmp.ne.s32.totalorder %s206, %s208
    %p212 = scmp.eq.s32.totalorder %s20, 0
    %p213 = por %p211, %p212
    %p214 = scmp.ne.s32.totalorder %s206, %s208
    %p215 = scmp.eq.s32.totalorder %s25, 1
    %p216 = por %p214, %p215
    %p217 = scmp.ne.s32.totalorder %s208, %s209
    %p218 = scmp.eq.s32.totalorder %s25, 0
    %p219 = por %p217, %p218
    %p220 = scmp.ne.s32.totalorder %s208, %s209
    %p221 = scmp.eq.s32.totalorder %s26, 1
    %p222 = por %p220, %p221
    %p224 = scmp.ne.s32.totalorder %s209, %s223
    %p225 = scmp.eq.s32.totalorder %s26, 0
    %p226 = por %p224, %p225
    %s228 = sadd.s32 %s227, 1
    %p231 = scmp.eq.s32.totalorder %s20, 1
    %p232 = scmp.ne.s32.totalorder %s227, %s229
    %p233 = scmp.eq.s32.totalorder %s20, 0
    %p234 = por %p232, %p233
    %p235 = scmp.ne.s32.totalorder %s227, %s229
    %p236 = scmp.eq.s32.totalorder %s25, 1
    %p237 = por %p235, %p236
    %p238 = scmp.ne.s32.totalorder %s229, %s230
    %p239 = scmp.eq.s32.totalorder %s25, 0
    %p240 = por %p238, %p239
    %p241 = scmp.ne.s32.totalorder %s229, %s230
    %p242 = scmp.eq.s32.totalorder %s26, 1
    %p243 = por %p241, %p242
    %p245 = scmp.ne.s32.totalorder %s230, %s244
    %p246 = scmp.eq.s32.totalorder %s26, 0
    %p247 = por %p245, %p246
    %s249 = sadd.s32 %s248, 1
    %p252 = scmp.eq.s32.totalorder %s20, 1
    %p253 = scmp.ne.s32.totalorder %s248, %s250
    %p254 = scmp.eq.s32.totalorder %s20, 0
    %p255 = por %p253, %p254
    %p256 = scmp.ne.s32.totalorder %s248, %s250
    %p257 = scmp.eq.s32.totalorder %s25, 1
    %p258 = por %p256, %p257
    %p259 = scmp.ne.s32.totalorder %s250, %s251
    %p260 = scmp.eq.s32.totalorder %s25, 0
    %p261 = por %p259, %p260
    %p262 = scmp.ne.s32.totalorder %s250, %s251
    %p263 = scmp.eq.s32.totalorder %s26, 1
    %p264 = por %p262, %p263
    %p266 = scmp.ne.s32.totalorder %s251, %s265
    %p267 = scmp.eq.s32.totalorder %s26, 0
    %p268 = por %p266, %p267
    %s270 = sadd.s32 %s269, 1
    %p273 = scmp.eq.s32.totalorder %s20, 1
    %p274 = scmp.ne.s32.totalorder %s269, %s271
    %p275 = scmp.eq.s32.totalorder %s20, 0
    %p276 = por %p274, %p275
    %p277 = scmp.ne.s32.totalorder %s269, %s271
    %p278 = scmp.eq.s32.totalorder %s25, 1
    %p279 = por %p277, %p278
    %p280 = scmp.ne.s32.totalorder %s271, %s272
    %p281 = scmp.eq.s32.totalorder %s25, 0
    %p282 = por %p280, %p281
    %p283 = scmp.ne.s32.totalorder %s271, %s272
    %p284 = scmp.eq.s32.totalorder %s26, 1
    %p285 = por %p283, %p284
    %p287 = scmp.ne.s32.totalorder %s272, %s286
    %p288 = scmp.eq.s32.totalorder %s26, 0
    %p289 = por %p287, %p288
    %s290 = ssub.s32 %s20, %s27
    %p291 = scmp.eq.s32.totalorder %s290, 0
    %s293 = sadd.s32 %s292, 1
    %s294 = scalar_select %p291, %s292, %s293
    %p297 = pneg %p291
    %p298 = scmp.eq.s32.totalorder %s20, 1
    %p299 = por %p297, %p298
    %p300 = scmp.ne.s32.totalorder %s292, %s295
    %p301 = scmp.eq.s32.totalorder %s20, 0
    %p302 = por %p300, %p301
    %p303 = scmp.ne.s32.totalorder %s292, %s295
    %p304 = scmp.eq.s32.totalorder %s25, 1
    %p305 = por %p303, %p304
    %p306 = scmp.ne.s32.totalorder %s295, %s296
    %p307 = scmp.eq.s32.totalorder %s25, 0
    %p308 = por %p306, %p307
    %p309 = scmp.ne.s32.totalorder %s295, %s296
    %p310 = scmp.eq.s32.totalorder %s26, 1
    %p311 = por %p309, %p310
    %p313 = scmp.ne.s32.totalorder %s296, %s312
    %p314 = scmp.eq.s32.totalorder %s26, 0
    %p315 = por %p313, %p314
    %p316 = scmp.le.s32.totalorder 1, %s20
    %p317 = scmp.lt.s32.totalorder %s20, 3
    %p318 = pnand %p316, %p317
    %p319 = pneg %p318
    // Predicated region
    $region9: #{tpu_custom_call.1} parent=5 // pred_check
      _
    $region10: #{tpu_custom_call.1} parent=5 // pred_check_branch
      %321 = sbr.rel (%p318) target = $region12
    $region11: #{tpu_custom_call.1} parent=5 // pred_region
      %s322 = ssub.s32 %s20, 1
      // Predicated region
      $region13: #{tpu_custom_call.1} parent=11 // pred_check
        %p323 = pneg %p93
      $region14: #{tpu_custom_call.1} parent=11 // pred_check_branch
        %325 = sbr.rel (%p323) target = $region16
      $region15: #{tpu_custom_call.1} parent=11 // pred_region
        _
      $region16: #{tpu_custom_call.1} parent=11 // pred_fallthru
        _
      // Predicated region
      $region17: #{tpu_custom_call.1} parent=11 // pred_check
        %p326 = pneg %p114
      $region18: #{tpu_custom_call.1} parent=11 // pred_check_branch
        %328 = sbr.rel (%p326) target = $region20
      $region19: #{tpu_custom_call.1} parent=11 // pred_region
        _
      $region20: #{tpu_custom_call.1} parent=11 // pred_fallthru
        _
      // Predicated region
      $region21: #{tpu_custom_call.1} parent=11 // pred_check
        %p329 = pneg %p135
      $region22: #{tpu_custom_call.1} parent=11 // pred_check_branch
        %331 = sbr.rel (%p329) target = $region24
      $region23: #{tpu_custom_call.1} parent=11 // pred_region
        _
      $region24: #{tpu_custom_call.1} parent=11 // pred_fallthru
        _
      // Predicated region
      $region25: #{tpu_custom_call.1} parent=11 // pred_check
        %p332 = pneg %p156
      $region26: #{tpu_custom_call.1} parent=11 // pred_check_branch
        %334 = sbr.rel (%p332) target = $region28
      $region27: #{tpu_custom_call.1} parent=11 // pred_region
        _
      $region28: #{tpu_custom_call.1} parent=11 // pred_fallthru
        _
      // Predicated region
      $region29: #{tpu_custom_call.1} parent=11 // pred_check
        %p335 = pneg %p177
      $region30: #{tpu_custom_call.1} parent=11 // pred_check_branch
        %337 = sbr.rel (%p335) target = $region32
      $region31: #{tpu_custom_call.1} parent=11 // pred_region
        _
      $region32: #{tpu_custom_call.1} parent=11 // pred_fallthru
        _
      // Predicated region
      $region33: #{tpu_custom_call.1} parent=11 // pred_check
        %p338 = pneg %p198
      $region34: #{tpu_custom_call.1} parent=11 // pred_check_branch
        %340 = sbr.rel (%p338) target = $region36
      $region35: #{tpu_custom_call.1} parent=11 // pred_region
        _
      $region36: #{tpu_custom_call.1} parent=11 // pred_fallthru
        _
      // Predicated region
      $region37: #{tpu_custom_call.1} parent=11 // pred_check
        %p341 = pneg %p219
      $region38: #{tpu_custom_call.1} parent=11 // pred_check_branch
        %343 = sbr.rel (%p341) target = $region40
      $region39: #{tpu_custom_call.1} parent=11 // pred_region
        _
      $region40: #{tpu_custom_call.1} parent=11 // pred_fallthru
        _
      // Predicated region
      $region41: #{tpu_custom_call.1} parent=11 // pred_check
        %p344 = pneg %p240
      $region42: #{tpu_custom_call.1} parent=11 // pred_check_branch
        %346 = sbr.rel (%p344) target = $region44
      $region43: #{tpu_custom_call.1} parent=11 // pred_region
        _
      $region44: #{tpu_custom_call.1} parent=11 // pred_fallthru
        _
      // Predicated region
      $region45: #{tpu_custom_call.1} parent=11 // pred_check
        %p347 = pneg %p261
      $region46: #{tpu_custom_call.1} parent=11 // pred_check_branch
        %349 = sbr.rel (%p347) target = $region48
      $region47: #{tpu_custom_call.1} parent=11 // pred_region
        _
      $region48: #{tpu_custom_call.1} parent=11 // pred_fallthru
        _
      // Predicated region
      $region49: #{tpu_custom_call.1} parent=11 // pred_check
        %p350 = pneg %p282
      $region50: #{tpu_custom_call.1} parent=11 // pred_check_branch
        %352 = sbr.rel (%p350) target = $region52
      $region51: #{tpu_custom_call.1} parent=11 // pred_region
        _
      $region52: #{tpu_custom_call.1} parent=11 // pred_fallthru
        _
    $region12: #{tpu_custom_call.1} parent=5 // pred_fallthru
      _
    %p353 = scmp.lt.s32.totalorder %s20, 2
    // Predicated region
    $region53: #{tpu_custom_call.1} parent=5 // pred_check
      %p354 = pneg %p353
    $region54: #{tpu_custom_call.1} parent=5 // pred_check_branch
      %356 = sbr.rel (%p354) target = $region56
    $region55: #{tpu_custom_call.1} parent=5 // pred_region
      // Predicated region
      $region57: #{tpu_custom_call.1} parent=55 // pred_check
        %p357 = pneg %p40
      $region58: #{tpu_custom_call.1} parent=55 // pred_check_branch
        %359 = sbr.rel (%p357) target = $region60
      $region59: #{tpu_custom_call.1} parent=55 // pred_region
        %p360 = scmp.lt.s32.totalorder %s20, 1
        %s361 = scalar_select %p360, %s20, 1
        %s362 = smul.addr %s361, 8
        %s363 = scalar_lea.vmem %s0, %s362
      $region60: #{tpu_custom_call.1} parent=55 // pred_fallthru
        _
      // Predicated region
      $region61: #{tpu_custom_call.1} parent=55 // pred_check
        %p364 = pneg %p66
      $region62: #{tpu_custom_call.1} parent=55 // pred_check_branch
        %366 = sbr.rel (%p364) target = $region64
      $region63: #{tpu_custom_call.1} parent=55 // pred_region
        %p367 = scmp.lt.s32.totalorder %s20, 1
        %s368 = scalar_select %p367, %s20, 1
        %s369 = smul.addr %s368, 8
        %s370 = scalar_lea.vmem %s1, %s369
      $region64: #{tpu_custom_call.1} parent=55 // pred_fallthru
        _
    $region56: #{tpu_custom_call.1} parent=5 // pred_fallthru
      _
    %p371 = scmp.le.s32.totalorder 1, %s20
    %p372 = scmp.lt.s32.totalorder %s20, 3
    %p373 = pnand %p371, %p372
    %p374 = pneg %p373
    // Predicated region
    $region65: #{tpu_custom_call.1} parent=5 // pred_check
      _
    $region66: #{tpu_custom_call.1} parent=5 // pred_check_branch
      %376 = sbr.rel (%p373) target = $region68
    $region67: #{tpu_custom_call.1} parent=5 // pred_region
      %s377 = ssub.s32 %s20, 1
      %p378 = scmp.lt.s32.totalorder %s25, 1
      %s379 = scalar_select %p378, %s25, 1
      %s380 = smul.addr %s379, 8
      %s381 = scalar_lea.vmem %s0, %s380
      %p382 = pneg %p46
      %p383 = pneg %p43
      %p384 = scmp.lt.s32.totalorder %s25, 1
      %s385 = scalar_select %p384, %s25, 1
      %s386 = smul.addr %s385, 8
      %s387 = scalar_lea.vmem %s1, %s386
      %p388 = pneg %p72
      %p389 = pneg %p69
      %p390 = pneg %p93
      %p391 = pneg %p90
      %p392 = pneg %p114
      %p393 = pneg %p111
      %p394 = pneg %p135
      %p395 = pneg %p132
      %p396 = pneg %p156
      %p397 = pneg %p153
      %p398 = pneg %p177
      %p399 = pneg %p174
      %p400 = pneg %p198
      %p401 = pneg %p195
      %p402 = pneg %p219
      %p403 = pneg %p216
      %p404 = pneg %p240
      %p405 = pneg %p237
      %p406 = pneg %p261
      %p407 = pneg %p258
      %p408 = pneg %p282
      %p409 = pneg %p279
      %p410 = pneg %p308
      %p411 = pneg %p305
      %p412 = scmp.lt.s32.totalorder %s25, 1
      %s413 = scalar_select %p412, %s25, 1
      %s414 = smul.addr %s413, 8
      %s415 = scalar_lea.vmem %s12, %s414
      %p416 = scmp.lt.s32.totalorder %s25, 1
      %s417 = scalar_select %p416, %s25, 1
      %s418 = smul.addr %s417, 8
      %s419 = scalar_lea.vmem %s0, %s418
      %p420 = scmp.lt.s32.totalorder %s25, 1
      %s421 = scalar_select %p420, %s25, 1
      %s422 = smul.addr %s421, 8
      %s423 = scalar_lea.vmem %s1, %s422
      %p424 = scmp.lt.s32.totalorder %s25, 1
      %s425 = scalar_select %p424, %s25, 1
      %s426 = smul.addr %s425, 8
      %s427 = scalar_lea.vmem %s12, %s426
      %v428 = vld [vmem:[%s419] sm:$0xff]
      %v429 = vld [vmem:[%s423] sm:$0xff]
      %430 = vst [vmem:[#allocation2] sm:$0xff] 0.0
      %vm431 = vcmask 523264
      %432 = vst.msk [vmem:[#allocation2 + $0x8] sm:$0xff] %vm431, 0.0
      %v434 = vrot.slane %v428, 7
      %vm436 = vcmask 261121
      %437 = vst.msk [vmem:[#allocation2] sm:$0xfe] %vm436, %v434
      %v439 = vrot.slane %v429, 7
      %440 = vrot.lane.b32.xlu0 %v439, 32
      %v441 = vpop.permute.xlu0 %440
      %vm443 = vcmask 523521
      %444 = vst.msk [vmem:[#allocation2] sm:$0xfe] %vm443, %v441
      %445 = vrot.lane.b32.xlu0 %v428, 64
      %v446 = vpop.permute.xlu0 %445
      %vm448 = vcmask 785920
      %449 = vst.msk [vmem:[#allocation2] sm:$0xff] %vm448, %v446
      %450 = vrot.lane.b32.xlu0 %v429, 96
      %v451 = vpop.permute.xlu0 %450
      %vm453 = vcmask 1048320
      %454 = vst.msk [vmem:[#allocation2] sm:$0xff] %vm453, %v451
      %v455 = vrot.slane %v428, 1
      %vm457 = vcmask 260096
      %458 = vst.msk [vmem:[#allocation2 + $0x8] sm:$0x7f] %vm457, %v455
      %v459 = vrot.slane %v429, 1
      %460 = vrot.lane.b32.xlu0 %v459, 32
      %v461 = vpop.permute.xlu0 %460
      %vm463 = vcmask 522496
      %464 = vst.msk [vmem:[#allocation2 + $0x8] sm:$0x7f] %vm463, %v461
      %v465 = vld [vmem:[#allocation2] sm:$0xff]
      %v466 = vld [vmem:[#allocation2 + $0x8] sm:$0xff]
      %v467 = vld [vmem:[%s2] sm:$0xff]
      %v468 = vld [vmem:[%s2 + $0x8] sm:$0xff]
      %v469 = vld [vmem:[%s2 + $0x10] sm:$0xff]
      %v470 = vld [vmem:[%s2 + $0x18] sm:$0xff]
      %v471 = vld [vmem:[%s2 + $0x20] sm:$0xff]
      %v472 = vld [vmem:[%s2 + $0x28] sm:$0xff]
      %v473 = vld [vmem:[%s2 + $0x30] sm:$0xff]
      %v474 = vld [vmem:[%s2 + $0x38] sm:$0xff]
      %v475 = vld [vmem:[%s2 + $0x40] sm:$0xff]
      %v476 = vld [vmem:[%s2 + $0x48] sm:$0xff]
      %v477 = vld [vmem:[%s2 + $0x50] sm:$0xff]
      %v478 = vld [vmem:[%s2 + $0x58] sm:$0xff]
      %v479 = vld [vmem:[%s2 + $0x60] sm:$0xff]
      %v480 = vld [vmem:[%s2 + $0x68] sm:$0xff]
      %v481 = vld [vmem:[%s2 + $0x70] sm:$0xff]
      %v482 = vld [vmem:[%s2 + $0x78] sm:$0xff]
      %v483 = vld [vmem:[%s2 + $0x80] sm:$0xff]
      %v484 = vld [vmem:[%s2 + $0x88] sm:$0xff]
      %v485 = vld [vmem:[%s2 + $0x90] sm:$0xff]
      %v486 = vld [vmem:[%s2 + $0x98] sm:$0xff]
      %v487 = vld [vmem:[%s2 + $0xa0] sm:$0xff]
      %v488 = vld [vmem:[%s2 + $0xa8] sm:$0xff]
      %v489 = vld [vmem:[%s2 + $0xb0] sm:$0xff]
      %v490 = vld [vmem:[%s2 + $0xb8] sm:$0xff]
      %v491 = vld [vmem:[%s3] sm:$0x1]
      %v493 = vlaneseq
      %v494 = vshrl.u32 %v493, 7
      %v495 = vsub.s32 0, %v494
      %v496 = vrot.slane %v491, %v495
      %v499 = vsel %vm431, %v466, 0
      %501 = vmatprep.subr.mxu0 0.0
      %502 = vmatpush1.msra.mxu0 %v467
      %503 = vmatprep.subr.mxu0 0.0
      %504 = vmatpush1.msra.mxu0 %v468
      %505 = vmatprep.subr.mxu0 0.0
      %506 = vmatpush1.msra.mxu0 %v469
      %507 = vmatprep.subr.mxu0 0.0
      %508 = vmatpush1.msra.mxu0 %v470
      %509 = vmatprep.subr.mxu0 0.0
      %510 = vmatpush1.msra.mxu0 %v471
      %511 = vmatprep.subr.mxu0 0.0
      %512 = vmatpush1.msra.mxu0 %v472
      %513 = vmatprep.subr.mxu0 0.0
      %514 = vmatpush1.msra.mxu0 %v473
      %515 = vmatprep.subr.mxu0 0.0
      %516 = vmatpush1.msra.mxu0 %v474
      %517 = vmatprep.subr.mxu0 0.0
      %518 = vmatpush1.msra.mxu0 %v475
      %519 = vmatprep.subr.mxu0 0.0
      %520 = vmatpush1.msra.mxu0 %v476
      %521 = vmatprep.subr.mxu0 0.0
      %522 = vmatpush1.msra.mxu0 %v477
      %523 = vmatprep.subr.mxu0 0.0
      %524 = vmatpush1.msra.mxu0 %v478
      %525 = vmatprep.subr.mxu0 0.0
      %526 = vmatpush1.msra.mxu0 %v479
      %527 = vmatprep.subr.mxu0 0.0
      %528 = vmatpush1.msra.mxu0 %v480
      %529 = vmatprep.subr.mxu0 0.0
      %530 = vmatpush1.msra.mxu0 %v481
      %531 = vmatprep.subr.mxu0 0.0
      %532 = vmatpush1.msra.mxu0 %v482
      %533 = vmatprep.subr.mxu0 0.0
      %534 = vmatpush1.msra.mxu0 %v483
      %535 = vmatprep.subr.mxu0 0.0
      %536 = vmatpush1.msra.mxu0 %v484
      %537 = vmatprep.subr.mxu0 0.0
      %538 = vmatpush1.msra.mxu0 %v485
      %539 = vmatprep.subr.mxu0 0.0
      %540 = vmatpush1.msra.mxu0 %v486
      %541 = vmatprep.subr.mxu0 0.0
      %542 = vmatpush1.msra.mxu0 %v487
      %543 = vmatprep.subr.mxu0 0.0
      %544 = vmatpush1.msra.mxu0 %v488
      %545 = vmatprep.subr.mxu0 0.0
      %546 = vmatpush1.msra.mxu0 %v489
      %547 = vmatprep.subr.mxu0 0.0
      %548 = vmatpush1.msra.mxu0 %v490
      %549 = vmatprep.subr.mxu0 0.0
      %550 = vmatpush1.msra.mxu0 0.0
      %551 = vmatprep.subr.mxu0 0.0
      %552 = vmatpush1.msra.mxu0 0.0
      %553 = vmatprep.subr.mxu0 0.0
      %554 = vmatpush1.msra.mxu0 0.0
      %555 = vmatprep.subr.mxu0 0.0
      %556 = vmatpush1.msra.mxu0 0.0
      %557 = vmatprep.subr.mxu0 0.0
      %558 = vmatpush1.msra.mxu0 0.0
      %559 = vmatprep.subr.mxu0 0.0
      %560 = vmatpush1.msra.mxu0 0.0
      %561 = vmatprep.subr.mxu0 0.0
      %562 = vmatpush1.msra.mxu0 0.0
      %563 = vmatprep.subr.mxu0 0.0
      %564 = vmatpush1.msra.mxu0 0.0
      %565 = vmatprep.mubr.f32.mxu0 %v499
      %566 = vmatmul.mubr.f32.gmra.mrb[0].mxu0 %v465
      %v567 = vpop.f32.mrb[0].mxu0
      %v568 = vadd.f32 %v496, %v567
      %v569 = vpop.f32.mrb[0].mxu0
      %570 = vdwg.mxu0
      %v571 = vmax.f32 %v568, 0.0
      %572 = vst [vmem:[#allocation2] sm:$0xff] 0.0
      %573 = vst.msk [vmem:[#allocation2 + $0x8] sm:$0xff] %vm431, 0.0
      %v575 = vrot.slane %v571, 2
      %vm577 = vcmask 64518
      %578 = vst.msk [vmem:[#allocation2] sm:$0xc0] %vm577, %v575
      %v579 = vrot.slane %v571, 3
      %580 = vrot.lane.b32.xlu0 %v579, 8
      %v581 = vpop.permute.xlu0 %580
      %vm583 = vcmask 130117
      %584 = vst.msk [vmem:[#allocation2] sm:$0xe0] %vm583, %v581
      %v585 = vrot.slane %v571, 4
      %586 = vrot.lane.b32.xlu0 %v585, 16
      %v587 = vpop.permute.xlu0 %586
      %vm589 = vcmask 195716
      %590 = vst.msk [vmem:[#allocation2] sm:$0xf0] %vm589, %v587
      %v591 = vrot.slane %v571, 5
      %592 = vrot.lane.b32.xlu0 %v591, 24
      %v593 = vpop.permute.xlu0 %592
      %vm595 = vcmask 261315
      %596 = vst.msk [vmem:[#allocation2] sm:$0xf8] %vm595, %v593
      %v597 = vrot.slane %v571, 6
      %598 = vrot.lane.b32.xlu0 %v597, 32
      %v599 = vpop.permute.xlu0 %598
      %vm601 = vcmask 326914
      %602 = vst.msk [vmem:[#allocation2] sm:$0xfc] %vm601, %v599
      %v603 = vrot.slane %v571, 7
      %604 = vrot.lane.b32.xlu0 %v603, 40
      %v605 = vpop.permute.xlu0 %604
      %vm607 = vcmask 392513
      %608 = vst.msk [vmem:[#allocation2] sm:$0xfe] %vm607, %v605
      %609 = vrot.lane.b32.xlu0 %v571, 48
      %v610 = vpop.permute.xlu0 %609
      %vm612 = vcmask 458112
      %613 = vst.msk [vmem:[#allocation2] sm:$0xff] %vm612, %v610
      %v614 = vrot.slane %v571, 1
      %615 = vrot.lane.b32.xlu0 %v614, 56
      %v616 = vpop.permute.xlu0 %615
      %vm618 = vcmask 522688
      %619 = vst.msk [vmem:[#allocation2] sm:$0x7f] %vm618, %v616
      %620 = vrot.lane.b32.xlu0 %v575, 64
      %v621 = vpop.permute.xlu0 %620
      %vm623 = vcmask 587264
      %624 = vst.msk [vmem:[#allocation2] sm:$0x3f] %vm623, %v621
      %625 = vrot.lane.b32.xlu0 %v579, 72
      %v626 = vpop.permute.xlu0 %625
      %vm628 = vcmask 651840
      %629 = vst.msk [vmem:[#allocation2] sm:$0x1f] %vm628, %v626
      %630 = vrot.lane.b32.xlu0 %v585, 80
      %v631 = vpop.permute.xlu0 %630
      %vm633 = vcmask 716416
      %634 = vst.msk [vmem:[#allocation2] sm:$0xf] %vm633, %v631
      %635 = vrot.lane.b32.xlu0 %v591, 88
      %v636 = vpop.permute.xlu0 %635
      %vm638 = vcmask 780992
      %639 = vst.msk [vmem:[#allocation2] sm:$0x7] %vm638, %v636
      %640 = vrot.lane.b32.xlu0 %v597, 96
      %v641 = vpop.permute.xlu0 %640
      %vm643 = vcmask 845568
      %644 = vst.msk [vmem:[#allocation2] sm:$0x3] %vm643, %v641
      %v645 = vld [vmem:[#allocation2] sm:$0xff]
      %v646 = vld [vmem:[%s4] sm:$0xff]
      %v647 = vld [vmem:[%s4 + $0x8] sm:$0xff]
      %v648 = vld [vmem:[%s4 + $0x10] sm:$0xff]
      %v649 = vld [vmem:[%s4 + $0x18] sm:$0xff]
      %v650 = vld [vmem:[%s4 + $0x20] sm:$0xff]
      %v651 = vld [vmem:[%s4 + $0x28] sm:$0xff]
      %v652 = vld [vmem:[%s4 + $0x30] sm:$0xff]
      %v653 = vld [vmem:[%s4 + $0x38] sm:$0xff]
      %v654 = vld [vmem:[%s4 + $0x40] sm:$0xff]
      %v655 = vld [vmem:[%s4 + $0x48] sm:$0xff]
      %v656 = vld [vmem:[%s4 + $0x50] sm:$0xff]
      %v657 = vld [vmem:[%s4 + $0x58] sm:$0xff]
      %v658 = vld [vmem:[%s4 + $0x60] sm:$0xff]
      %v659 = vld [vmem:[%s5] sm:$0x1]
      %v661 = vlaneseq
      %v662 = vshrl.u32 %v661, 7
      %v663 = vsub.s32 0, %v662
      %v664 = vrot.slane %v659, %v663
      %vm666 = vcmask 850944
      %v668 = vsel %vm666, %v645, 0
      %670 = vmatprep.subr.mxu0 0.0
      %671 = vmatpush1.msra.mxu0 %v646
      %672 = vmatprep.subr.mxu0 0.0
      %673 = vmatpush1.msra.mxu0 %v647
      %674 = vmatprep.subr.mxu0 0.0
      %675 = vmatpush1.msra.mxu0 %v648
      %676 = vmatprep.subr.mxu0 0.0
      %677 = vmatpush1.msra.mxu0 %v649
      %678 = vmatprep.subr.mxu0 0.0
      %679 = vmatpush1.msra.mxu0 %v650
      %680 = vmatprep.subr.mxu0 0.0
      %681 = vmatpush1.msra.mxu0 %v651
      %682 = vmatprep.subr.mxu0 0.0
      %683 = vmatpush1.msra.mxu0 %v652
      %684 = vmatprep.subr.mxu0 0.0
      %685 = vmatpush1.msra.mxu0 %v653
      %686 = vmatprep.subr.mxu0 0.0
      %687 = vmatpush1.msra.mxu0 %v654
      %688 = vmatprep.subr.mxu0 0.0
      %689 = vmatpush1.msra.mxu0 %v655
      %690 = vmatprep.subr.mxu0 0.0
      %691 = vmatpush1.msra.mxu0 %v656
      %692 = vmatprep.subr.mxu0 0.0
      %693 = vmatpush1.msra.mxu0 %v657
      %694 = vmatprep.subr.mxu0 0.0
      %695 = vmatpush1.msra.mxu0 %v658
      %696 = vmatprep.subr.mxu0 0.0
      %697 = vmatpush1.msra.mxu0 0.0
      %698 = vmatprep.subr.mxu0 0.0
      %699 = vmatpush1.msra.mxu0 0.0
      %700 = vmatprep.subr.mxu0 0.0
      %701 = vmatpush1.msra.mxu0 0.0
      %702 = vmatprep.subr.mxu0 0.0
      %703 = vmatpush1.msra.mxu0 0.0
      %704 = vmatprep.subr.mxu0 0.0
      %705 = vmatpush1.msra.mxu0 0.0
      %706 = vmatprep.subr.mxu0 0.0
      %707 = vmatpush1.msra.mxu0 0.0
      %708 = vmatprep.subr.mxu0 0.0
      %709 = vmatpush1.msra.mxu0 0.0
      %710 = vmatprep.subr.mxu0 0.0
      %711 = vmatpush1.msra.mxu0 0.0
      %712 = vmatprep.subr.mxu0 0.0
      %713 = vmatpush1.msra.mxu0 0.0
      %714 = vmatprep.subr.mxu0 0.0
      %715 = vmatpush1.msra.mxu0 0.0
      %716 = vmatprep.subr.mxu0 0.0
      %717 = vmatpush1.msra.mxu0 0.0
      %718 = vmatprep.subr.mxu0 0.0
      %719 = vmatpush1.msra.mxu0 0.0
      %720 = vmatprep.subr.mxu0 0.0
      %721 = vmatpush1.msra.mxu0 0.0
      %722 = vmatprep.subr.mxu0 0.0
      %723 = vmatpush1.msra.mxu0 0.0
      %724 = vmatprep.subr.mxu0 0.0
      %725 = vmatpush1.msra.mxu0 0.0
      %726 = vmatprep.subr.mxu0 0.0
      %727 = vmatpush1.msra.mxu0 0.0
      %728 = vmatprep.subr.mxu0 0.0
      %729 = vmatpush1.msra.mxu0 0.0
      %730 = vmatprep.subr.mxu0 0.0
      %731 = vmatpush1.msra.mxu0 0.0
      %732 = vmatprep.subr.mxu0 0.0
      %733 = vmatpush1.msra.mxu0 0.0
      %734 = vmatprep.mubr.f32.mxu0 0.0
      %735 = vmatmul.mubr.f32.gmra.mrb[0].mxu0 %v668
      %v736 = vpop.f32.mrb[0].mxu0
      %v737 = vadd.f32 %v664, %v736
      %v738 = vpop.f32.mrb[0].mxu0
      %739 = vdwg.mxu0
      %v740 = vmax.f32 %v737, 0.0
      %741 = vst [vmem:[#allocation2] sm:$0xff] 0.0
      %742 = vst.msk [vmem:[#allocation2 + $0x8] sm:$0xff] %vm431, 0.0
      %v744 = vrot.slane %v740, 7
      %vm746 = vcmask 64513
      %747 = vst.msk [vmem:[#allocation2] sm:$0xfe] %vm746, %v744
      %748 = vrot.lane.b32.xlu0 %v740, 8
      %v749 = vpop.permute.xlu0 %748
      %vm751 = vcmask 130112
      %752 = vst.msk [vmem:[#allocation2] sm:$0xff] %vm751, %v749
      %v753 = vrot.slane %v740, 1
      %754 = vrot.lane.b32.xlu0 %v753, 16
      %v755 = vpop.permute.xlu0 %754
      %vm757 = vcmask 194688
      %758 = vst.msk [vmem:[#allocation2] sm:$0x7f] %vm757, %v755
      %v759 = vld [vmem:[#allocation2] sm:$0xff]
      %v760 = vld [vmem:[%s6] sm:$0xff]
      %v761 = vld [vmem:[%s6 + $0x8] sm:$0xff]
      %v762 = vld [vmem:[%s6 + $0x10] sm:$0xff]
      %v763 = vld [vmem:[%s7] sm:$0x1]
      %v765 = vlaneseq
      %v766 = vshrl.u32 %v765, 7
      %v767 = vsub.s32 0, %v766
      %v768 = vrot.slane %v763, %v767
      %vm770 = vcmask 195584
      %v772 = vsel %vm770, %v759, 0
      %774 = vmatprep.subr.mxu0 0.0
      %775 = vmatpush1.msra.mxu0 %v760
      %776 = vmatprep.subr.mxu0 0.0
      %777 = vmatpush1.msra.mxu0 %v761
      %778 = vmatprep.subr.mxu0 0.0
      %779 = vmatpush1.msra.mxu0 %v762
      %780 = vmatprep.subr.mxu0 0.0
      %781 = vmatpush1.msra.mxu0 0.0
      %782 = vmatprep.subr.mxu0 0.0
      %783 = vmatpush1.msra.mxu0 0.0
      %784 = vmatprep.subr.mxu0 0.0
      %785 = vmatpush1.msra.mxu0 0.0
      %786 = vmatprep.subr.mxu0 0.0
      %787 = vmatpush1.msra.mxu0 0.0
      %788 = vmatprep.subr.mxu0 0.0
      %789 = vmatpush1.msra.mxu0 0.0
      %790 = vmatprep.subr.mxu0 0.0
      %791 = vmatpush1.msra.mxu0 0.0
      %792 = vmatprep.subr.mxu0 0.0
      %793 = vmatpush1.msra.mxu0 0.0
      %794 = vmatprep.subr.mxu0 0.0
      %795 = vmatpush1.msra.mxu0 0.0
      %796 = vmatprep.subr.mxu0 0.0
      %797 = vmatpush1.msra.mxu0 0.0
      %798 = vmatprep.subr.mxu0 0.0
      %799 = vmatpush1.msra.mxu0 0.0
      %800 = vmatprep.subr.mxu0 0.0
      %801 = vmatpush1.msra.mxu0 0.0
      %802 = vmatprep.subr.mxu0 0.0
      %803 = vmatpush1.msra.mxu0 0.0
      %804 = vmatprep.subr.mxu0 0.0
      %805 = vmatpush1.msra.mxu0 0.0
      %806 = vmatprep.subr.mxu0 0.0
      %807 = vmatpush1.msra.mxu0 0.0
      %808 = vmatprep.subr.mxu0 0.0
      %809 = vmatpush1.msra.mxu0 0.0
      %810 = vmatprep.subr.mxu0 0.0
      %811 = vmatpush1.msra.mxu0 0.0
      %812 = vmatprep.subr.mxu0 0.0
      %813 = vmatpush1.msra.mxu0 0.0
      %814 = vmatprep.subr.mxu0 0.0
      %815 = vmatpush1.msra.mxu0 0.0
      %816 = vmatprep.subr.mxu0 0.0
      %817 = vmatpush1.msra.mxu0 0.0
      %818 = vmatprep.subr.mxu0 0.0
      %819 = vmatpush1.msra.mxu0 0.0
      %820 = vmatprep.subr.mxu0 0.0
      %821 = vmatpush1.msra.mxu0 0.0
      %822 = vmatprep.subr.mxu0 0.0
      %823 = vmatpush1.msra.mxu0 0.0
      %824 = vmatprep.subr.mxu0 0.0
      %825 = vmatpush1.msra.mxu0 0.0
      %826 = vmatprep.subr.mxu0 0.0
      %827 = vmatpush1.msra.mxu0 0.0
      %828 = vmatprep.subr.mxu0 0.0
      %829 = vmatpush1.msra.mxu0 0.0
      %830 = vmatprep.subr.mxu0 0.0
      %831 = vmatpush1.msra.mxu0 0.0
      %832 = vmatprep.subr.mxu0 0.0
      %833 = vmatpush1.msra.mxu0 0.0
      %834 = vmatprep.subr.mxu0 0.0
      %835 = vmatpush1.msra.mxu0 0.0
      %836 = vmatprep.subr.mxu0 0.0
      %837 = vmatpush1.msra.mxu0 0.0
      %838 = vmatprep.mubr.f32.mxu0 0.0
      %839 = vmatmul.mubr.f32.gmra.mrb[0].mxu0 %v772
      %v840 = vpop.f32.mrb[0].mxu0
      %v841 = vadd.f32 %v768, %v840
      %v842 = vpop.f32.mrb[0].mxu0
      %843 = vdwg.mxu0
      %v844 = vmax.f32 %v841, 0.0
      %845 = vst [vmem:[#allocation2] sm:$0xff] 0.0
      %846 = vst.msk [vmem:[#allocation2 + $0x8] sm:$0xff] %vm431, 0.0
      %v848 = vrot.slane %v844, 6
      %vm850 = vcmask 64514
      %851 = vst.msk [vmem:[#allocation2] sm:$0xfc] %vm850, %v848
      %v852 = vrot.slane %v844, 7
      %853 = vrot.lane.b32.xlu0 %v852, 8
      %v854 = vpop.permute.xlu0 %853
      %vm856 = vcmask 130113
      %857 = vst.msk [vmem:[#allocation2] sm:$0xfe] %vm856, %v854
      %858 = vrot.lane.b32.xlu0 %v844, 16
      %v859 = vpop.permute.xlu0 %858
      %vm861 = vcmask 195712
      %862 = vst.msk [vmem:[#allocation2] sm:$0xff] %vm861, %v859
      %v863 = vrot.slane %v844, 1
      %864 = vrot.lane.b32.xlu0 %v863, 24
      %v865 = vpop.permute.xlu0 %864
      %vm867 = vcmask 260288
      %868 = vst.msk [vmem:[#allocation2] sm:$0x7f] %vm867, %v865
      %v869 = vrot.slane %v844, 2
      %870 = vrot.lane.b32.xlu0 %v869, 32
      %v871 = vpop.permute.xlu0 %870
      %vm873 = vcmask 324864
      %874 = vst.msk [vmem:[#allocation2] sm:$0x3f] %vm873, %v871
      %v875 = vld [vmem:[#allocation2] sm:$0xff]
      %v876 = vld [vmem:[%s8] sm:$0xff]
      %v877 = vld [vmem:[%s8 + $0x8] sm:$0xff]
      %v878 = vld [vmem:[%s8 + $0x10] sm:$0xff]
      %v879 = vld [vmem:[%s8 + $0x18] sm:$0xff]
      %v880 = vld [vmem:[%s8 + $0x20] sm:$0xff]
      %v881 = vld [vmem:[%s9] sm:$0x1]
      %v883 = vlaneseq
      %v884 = vshrl.u32 %v883, 7
      %v885 = vsub.s32 0, %v884
      %v886 = vrot.slane %v881, %v885
      %vm888 = vcmask 326656
      %v890 = vsel %vm888, %v875, 0
      %892 = vmatprep.subr.mxu0 0.0
      %893 = vmatpush1.msra.mxu0 %v876
      %894 = vmatprep.subr.mxu0 0.0
      %895 = vmatpush1.msra.mxu0 %v877
      %896 = vmatprep.subr.mxu0 0.0
      %897 = vmatpush1.msra.mxu0 %v878
      %898 = vmatprep.subr.mxu0 0.0
      %899 = vmatpush1.msra.mxu0 %v879
      %900 = vmatprep.subr.mxu0 0.0
      %901 = vmatpush1.msra.mxu0 %v880
      %902 = vmatprep.subr.mxu0 0.0
      %903 = vmatpush1.msra.mxu0 0.0
      %904 = vmatprep.subr.mxu0 0.0
      %905 = vmatpush1.msra.mxu0 0.0
      %906 = vmatprep.subr.mxu0 0.0
      %907 = vmatpush1.msra.mxu0 0.0
      %908 = vmatprep.subr.mxu0 0.0
      %909 = vmatpush1.msra.mxu0 0.0
      %910 = vmatprep.subr.mxu0 0.0
      %911 = vmatpush1.msra.mxu0 0.0
      %912 = vmatprep.subr.mxu0 0.0
      %913 = vmatpush1.msra.mxu0 0.0
      %914 = vmatprep.subr.mxu0 0.0
      %915 = vmatpush1.msra.mxu0 0.0
      %916 = vmatprep.subr.mxu0 0.0
      %917 = vmatpush1.msra.mxu0 0.0
      %918 = vmatprep.subr.mxu0 0.0
      %919 = vmatpush1.msra.mxu0 0.0
      %920 = vmatprep.subr.mxu0 0.0
      %921 = vmatpush1.msra.mxu0 0.0
      %922 = vmatprep.subr.mxu0 0.0
      %923 = vmatpush1.msra.mxu0 0.0
      %924 = vmatprep.subr.mxu0 0.0
      %925 = vmatpush1.msra.mxu0 0.0
      %926 = vmatprep.subr.mxu0 0.0
      %927 = vmatpush1.msra.mxu0 0.0
      %928 = vmatprep.subr.mxu0 0.0
      %929 = vmatpush1.msra.mxu0 0.0
      %930 = vmatprep.subr.mxu0 0.0
      %931 = vmatpush1.msra.mxu0 0.0
      %932 = vmatprep.subr.mxu0 0.0
      %933 = vmatpush1.msra.mxu0 0.0
      %934 = vmatprep.subr.mxu0 0.0
      %935 = vmatpush1.msra.mxu0 0.0
      %936 = vmatprep.subr.mxu0 0.0
      %937 = vmatpush1.msra.mxu0 0.0
      %938 = vmatprep.subr.mxu0 0.0
      %939 = vmatpush1.msra.mxu0 0.0
      %940 = vmatprep.subr.mxu0 0.0
      %941 = vmatpush1.msra.mxu0 0.0
      %942 = vmatprep.subr.mxu0 0.0
      %943 = vmatpush1.msra.mxu0 0.0
      %944 = vmatprep.subr.mxu0 0.0
      %945 = vmatpush1.msra.mxu0 0.0
      %946 = vmatprep.subr.mxu0 0.0
      %947 = vmatpush1.msra.mxu0 0.0
      %948 = vmatprep.subr.mxu0 0.0
      %949 = vmatpush1.msra.mxu0 0.0
      %950 = vmatprep.subr.mxu0 0.0
      %951 = vmatpush1.msra.mxu0 0.0
      %952 = vmatprep.subr.mxu0 0.0
      %953 = vmatpush1.msra.mxu0 0.0
      %954 = vmatprep.subr.mxu0 0.0
      %955 = vmatpush1.msra.mxu0 0.0
      %956 = vmatprep.mubr.f32.mxu0 0.0
      %957 = vmatmul.mubr.f32.gmra.mrb[0].mxu0 %v890
      %v958 = vpop.f32.mrb[0].mxu0
      %v959 = vadd.f32 %v886, %v958
      %v960 = vpop.f32.mrb[0].mxu0
      %961 = vdwg.mxu0
      %v962 = vmax.f32 %v959, 0.0
      %963 = vst [vmem:[#allocation2] sm:$0xff] 0.0
      %964 = vst.msk [vmem:[#allocation2 + $0x8] sm:$0xff] %vm431, 0.0
      %v966 = vrot.slane %v962, 7
      %968 = vst.msk [vmem:[#allocation2] sm:$0xfe] %vm746, %v966
      %969 = vrot.lane.b32.xlu0 %v962, 8
      %v970 = vpop.permute.xlu0 %969
      %972 = vst.msk [vmem:[#allocation2] sm:$0xff] %vm751, %v970
      %v973 = vrot.slane %v962, 1
      %974 = vrot.lane.b32.xlu0 %v973, 16
      %v975 = vpop.permute.xlu0 %974
      %977 = vst.msk [vmem:[#allocation2] sm:$0x7f] %vm757, %v975
      %v978 = vld [vmem:[#allocation2] sm:$0xff]
      %v979 = vld [vmem:[%s10] sm:$0xff]
      %v980 = vld [vmem:[%s10 + $0x8] sm:$0xff]
      %v981 = vld [vmem:[%s10 + $0x10] sm:$0xff]
      %v982 = vld [vmem:[#allocation3] sm:$0x1]
      %v984 = vlaneseq
      %v985 = vshrl.u32 %v984, 7
      %v986 = vsub.s32 0, %v985
      %v987 = vrot.slane %v982, %v986
      %v990 = vsel %vm770, %v978, 0
      %992 = vmatprep.subr.mxu0 0.0
      %993 = vmatpush1.msra.mxu0 %v979
      %994 = vmatprep.subr.mxu0 0.0
      %995 = vmatpush1.msra.mxu0 %v980
      %996 = vmatprep.subr.mxu0 0.0
      %997 = vmatpush1.msra.mxu0 %v981
      %998 = vmatprep.subr.mxu0 0.0
      %999 = vmatpush1.msra.mxu0 0.0
      %1000 = vmatprep.subr.mxu0 0.0
      %1001 = vmatpush1.msra.mxu0 0.0
      %1002 = vmatprep.subr.mxu0 0.0
      %1003 = vmatpush1.msra.mxu0 0.0
      %1004 = vmatprep.subr.mxu0 0.0
      %1005 = vmatpush1.msra.mxu0 0.0
      %1006 = vmatprep.subr.mxu0 0.0
      %1007 = vmatpush1.msra.mxu0 0.0
      %1008 = vmatprep.subr.mxu0 0.0
      %1009 = vmatpush1.msra.mxu0 0.0
      %1010 = vmatprep.subr.mxu0 0.0
      %1011 = vmatpush1.msra.mxu0 0.0
      %1012 = vmatprep.subr.mxu0 0.0
      %1013 = vmatpush1.msra.mxu0 0.0
      %1014 = vmatprep.subr.mxu0 0.0
      %1015 = vmatpush1.msra.mxu0 0.0
      %1016 = vmatprep.subr.mxu0 0.0
      %1017 = vmatpush1.msra.mxu0 0.0
      %1018 = vmatprep.subr.mxu0 0.0
      %1019 = vmatpush1.msra.mxu0 0.0
      %1020 = vmatprep.subr.mxu0 0.0
      %1021 = vmatpush1.msra.mxu0 0.0
      %1022 = vmatprep.subr.mxu0 0.0
      %1023 = vmatpush1.msra.mxu0 0.0
      %1024 = vmatprep.subr.mxu0 0.0
      %1025 = vmatpush1.msra.mxu0 0.0
      %1026 = vmatprep.subr.mxu0 0.0
      %1027 = vmatpush1.msra.mxu0 0.0
      %1028 = vmatprep.subr.mxu0 0.0
      %1029 = vmatpush1.msra.mxu0 0.0
      %1030 = vmatprep.subr.mxu0 0.0
      %1031 = vmatpush1.msra.mxu0 0.0
      %1032 = vmatprep.subr.mxu0 0.0
      %1033 = vmatpush1.msra.mxu0 0.0
      %1034 = vmatprep.subr.mxu0 0.0
      %1035 = vmatpush1.msra.mxu0 0.0
      %1036 = vmatprep.subr.mxu0 0.0
      %1037 = vmatpush1.msra.mxu0 0.0
      %1038 = vmatprep.subr.mxu0 0.0
      %1039 = vmatpush1.msra.mxu0 0.0
      %1040 = vmatprep.subr.mxu0 0.0
      %1041 = vmatpush1.msra.mxu0 0.0
      %1042 = vmatprep.subr.mxu0 0.0
      %1043 = vmatpush1.msra.mxu0 0.0
      %1044 = vmatprep.subr.mxu0 0.0
      %1045 = vmatpush1.msra.mxu0 0.0
      %1046 = vmatprep.subr.mxu0 0.0
      %1047 = vmatpush1.msra.mxu0 0.0
      %1048 = vmatprep.subr.mxu0 0.0
      %1049 = vmatpush1.msra.mxu0 0.0
      %1050 = vmatprep.subr.mxu0 0.0
      %1051 = vmatpush1.msra.mxu0 0.0
      %1052 = vmatprep.subr.mxu0 0.0
      %1053 = vmatpush1.msra.mxu0 0.0
      %1054 = vmatprep.subr.mxu0 0.0
      %1055 = vmatpush1.msra.mxu0 0.0
      %1056 = vmatprep.mubr.f32.mxu0 0.0
      %1057 = vmatmul.mubr.f32.gmra.mrb[0].mxu0 %v990
      %v1058 = vpop.f32.mrb[0].mxu0
      %v1059 = vadd.f32 %v987, %v1058
      %v1060 = vpop.f32.mrb[0].mxu0
      %1061 = vdwg.mxu0
      %v1062 = vmax.f32 %v1059, 0.0
      %vm1063 = vcmask 7168
      %1064 = vst.msk [vmem:[%s427] sm:$0xff] %vm1063, %v1062
      %p1065 = scmp.lt.s32.totalorder %s25, 1
      %s1066 = scalar_select %p1065, %s25, 1
      %s1067 = smul.addr %s1066, 8
      %s1068 = scalar_lea.vmem %s12, %s1067
      // Predicated region
      $region69: #{tpu_custom_call.1} parent=67 // pred_check
        %p1069 = pneg %p305
      $region70: #{tpu_custom_call.1} parent=67 // pred_check_branch
        %1071 = sbr.rel (%p1069) target = $region72
      $region71: #{tpu_custom_call.1} parent=67 // pred_region
        _
      $region72: #{tpu_custom_call.1} parent=67 // pred_fallthru
        _
    $region68: #{tpu_custom_call.1} parent=5 // pred_fallthru
      _
    %p1072 = scmp.le.s32.totalorder 2, %s20
    // Predicated region
    $region73: #{tpu_custom_call.1} parent=5 // pred_check
      %p1073 = pneg %p1072
    $region74: #{tpu_custom_call.1} parent=5 // pred_check_branch
      %1075 = sbr.rel (%p1073) target = $region76
    $region75: #{tpu_custom_call.1} parent=5 // pred_region
      %s1076 = ssub.s32 %s20, 2
      // Predicated region
      $region77: #{tpu_custom_call.1} parent=75 // pred_check
        %p1077 = pneg %p311
      $region78: #{tpu_custom_call.1} parent=75 // pred_check_branch
        %1079 = sbr.rel (%p1077) target = $region80
      $region79: #{tpu_custom_call.1} parent=75 // pred_region
        %p1080 = scmp.lt.s32.totalorder %s26, 1
        %s1081 = scalar_select %p1080, %s26, 1
        %s1082 = smul.addr %s1081, 8
        %s1083 = scalar_lea.vmem %s12, %s1082
      $region80: #{tpu_custom_call.1} parent=75 // pred_fallthru
        _
    $region76: #{tpu_custom_call.1} parent=5 // pred_fallthru
      _
  $region6: #{tpu_custom_call.1} parent=0 // loop_footer
    %s24 = sadd.s32 1, %s20
  $region7: #{tpu_custom_call.1} parent=0 // loop_footer_branch
    %19 = sbr.rel target = $region3
  $region8: #{tpu_custom_call.1} parent=0 // loop_exit
    _

</llo_original>
